<compile_context>
chip_gen: v7x
topology: tpu7x:2x2x1
jax: 0.10.0
libtpu: 0.0.40
codegen_flags: <defaults>
</compile_context>

<pallas_src>
import functools
import math

import jax
import jax.numpy as jnp
from jax import lax
from jax.experimental import pallas as pl
from jax.experimental.pallas import tpu as pltpu


def _layernorm(y, gamma, beta, eps=1e-5):
    mu = jnp.mean(y, axis=-1, keepdims=True)
    var = jnp.mean((y - mu) ** 2, axis=-1, keepdims=True)
    return (y - mu) * lax.rsqrt(var + eps) * gamma + beta


def encoder_layer_kernel(x_ref, wq_ref, wk_ref, wv_ref, wo_ref,
                         w1_ref, b1_ref, w2_ref, b2_ref,
                         g1_ref, be1_ref, g2_ref, be2_ref,
                         o_ref,
                         q_scr, k_scr, v_scr, ctx_scr,
                         *, num_heads, d_k, block_b, seq_len):
    bb, S = block_b, seq_len
    D = num_heads * d_k
    rows = bb * S

    # Fold the batch tile into the row (M) dimension for all dense matmuls.
    x = x_ref[...].reshape(rows, D)  # f32 slab, reused for residuals / LayerNorm

    # --- QKV projections: one K=D matmul each, written straight into VMEM scratch.
    #     (1/sqrt(d_k) is pre-folded into wq host-side, so no per-step scale here.)
    q_scr[...] = jnp.dot(x, wq_ref[...], preferred_element_type=jnp.float32)
    k_scr[...] = jnp.dot(x, wk_ref[...], preferred_element_type=jnp.float32)
    v_scr[...] = jnp.dot(x, wv_ref[...], preferred_element_type=jnp.float32)

    def attn_batch(b, carry):
        r0 = b * S
        if S % 8 == 0:
            r0 = pl.multiple_of(r0, 8)  # sublane-aligned dynamic row start
        # Heads stay a static Python loop: column offsets are static (no dynamic lane-dim
        # addressing) and each head's ctx is committed to ctx_scr immediately, so only one
        # (S, S) score tile is live at a time.
        for h in range(num_heads):
            c0, c1 = h * d_k, (h + 1) * d_k
            qh = q_scr[pl.ds(r0, S), c0:c1]          # (S, d_k)
            kh = k_scr[pl.ds(r0, S), c0:c1]          # (S, d_k)
            vh = v_scr[pl.ds(r0, S), c0:c1]          # (S, d_k)
            # scores = qh @ kh^T without materializing a transpose (contract last dims).
            s = lax.dot_general(qh, kh, (((1,), (1,)), ((), ())),
                                preferred_element_type=jnp.float32)      # (S, S)
            s = s - jnp.max(s, axis=-1, keepdims=True)
            p = jnp.exp(s)
            p = p * pl.reciprocal(jnp.sum(p, axis=-1, keepdims=True), approx=True)
            ctx_scr[pl.ds(r0, S), c0:c1] = jnp.dot(
                p, vh, preferred_element_type=jnp.float32)               # (S, d_k)
        return carry

    lax.fori_loop(0, bb, attn_batch, 0)

    # --- Single fused output projection (K = D): full MXU row utilization.
    attn = jnp.dot(ctx_scr[...], wo_ref[...], preferred_element_type=jnp.float32)

    # --- residual + LayerNorm 1 (dropout = identity in eval) ---
    x1 = _layernorm(x + attn, g1_ref[...], be1_ref[...])

    # --- FeedForward ---
    h1 = jnp.dot(x1, w1_ref[...], preferred_element_type=jnp.float32) + b1_ref[...]
    h1 = jnp.maximum(h1, 0.0)
    ffn = jnp.dot(h1, w2_ref[...], preferred_element_type=jnp.float32) + b2_ref[...]

    # --- residual + LayerNorm 2 ---
    out = _layernorm(x1 + ffn, g2_ref[...], be2_ref[...])
    o_ref[...] = out.reshape(bb, S, D).astype(o_ref.dtype)


def _pick_block_b(B, S, target_rows=512):
    """Largest divisor of B with block_b*S near target_rows, while guaranteeing
    at least 2 grid steps when B > 1 (so both v7x TensorCores get a 'parallel' step)."""
    max_bb = max(1, B // 2) if B > 1 else 1
    best = 1
    for d in range(1, max_bb + 1):
        if B % d == 0 and d * S <= max(target_rows, S):
            best = d
    return best


def _vmem_limit_bytes():
    """Generation-aware scoped-VMEM limit: ~75% of physical VMEM, capped at 96 MiB.
    (v7x: 64 MiB physical -> 48 MiB; v5e/v6e: 128 MiB -> 96 MiB.)"""
    cap = 128 * 1024 * 1024
    try:
        info = pltpu.get_tpu_info()
        cap = int(getattr(info, "vmem_capacity_bytes", cap))
    except Exception:
        pass
    return max(32 * 1024 * 1024, min((cap * 3) // 4, 96 * 1024 * 1024))


def encoder_layer(x, params, *, num_heads):
    B, S, D = x.shape
    d_ff = params["w1"].shape[1]
    assert D % num_heads == 0
    d_k = D // num_heads
    block_b = _pick_block_b(B, S)
    nb = B // block_b
    rows = block_b * S

    f32 = jnp.float32
    inv_scale = 1.0 / math.sqrt(d_k)

    def full(shape):
        # Grid-invariant weights: single-buffered (no pointless double-buffering).
        return pl.BlockSpec(shape, lambda b: tuple(0 for _ in shape),
                            pipeline_mode=pl.Buffered(1))

    kernel = functools.partial(encoder_layer_kernel, num_heads=num_heads,
                               d_k=d_k, block_b=block_b, seq_len=S)

    return pl.pallas_call(
        kernel,
        out_shape=jax.ShapeDtypeStruct((B, S, D), f32),
        grid_spec=pltpu.PrefetchScalarGridSpec(
            num_scalar_prefetch=0,
            grid=(nb,),
            in_specs=[
                pl.BlockSpec((block_b, S, D), lambda b: (b, 0, 0)),        # x
                full((D, D)), full((D, D)), full((D, D)), full((D, D)),    # Wq Wk Wv Wo
                full((D, d_ff)), full((1, d_ff)),                          # W1, b1
                full((d_ff, D)), full((1, D)),                             # W2, b2
                full((1, D)), full((1, D)),                                # ln1 gamma, beta
                full((1, D)), full((1, D)),                                # ln2 gamma, beta
            ],
            out_specs=pl.BlockSpec((block_b, S, D), lambda b: (b, 0, 0)),
            scratch_shapes=[
                pltpu.VMEM((rows, D), f32),   # Q
                pltpu.VMEM((rows, D), f32),   # K
                pltpu.VMEM((rows, D), f32),   # V
                pltpu.VMEM((rows, D), f32),   # per-head context (pre-W_o)
            ],
        ),
        compiler_params=pltpu.CompilerParams(
            dimension_semantics=("parallel",),
            vmem_limit_bytes=_vmem_limit_bytes(),
        ),
    )(x.astype(f32),
      (params["wq"] * inv_scale).astype(f32),              # fold 1/sqrt(d_k) into Wq
      params["wk"].astype(f32), params["wv"].astype(f32), params["wo"].astype(f32),
      params["w1"].astype(f32), params["b1"].astype(f32),
      params["w2"].astype(f32), params["b2"].astype(f32),
      params["g1"].astype(f32), params["be1"].astype(f32),
      params["g2"].astype(f32), params["be2"].astype(f32))


def reference_encoder_layer(x, params, *, num_heads):
    """Pure-JAX f32 reference (mirrors the PyTorch forward, dropout = identity)."""
    B, S, D = x.shape
    d_k = D // num_heads
    q = x @ params["wq"]
    k = x @ params["wk"]
    v = x @ params["wv"]

    def split(t):  # (B,S,D) -> (B,H,S,dk)
        return t.reshape(B, S, num_heads, d_k).transpose(0, 2, 1, 3)

    Q, K, V = split(q), split(k), split(v)
    scores = jnp.einsum("bhqd,bhkd->bhqk", Q, K) / math.sqrt(d_k)
    w = jax.nn.softmax(scores, axis=-1)
    out = jnp.einsum("bhqk,bhkd->bhqd", w, V)
    out = out.transpose(0, 2, 1, 3).reshape(B, S, D)
    attn = out @ params["wo"]

    def ln(y, g, b):
        mu = jnp.mean(y, axis=-1, keepdims=True)
        var = jnp.mean((y - mu) ** 2, axis=-1, keepdims=True)
        return (y - mu) / jnp.sqrt(var + 1e-5) * g + b

    x1 = ln(x + attn, params["g1"], params["be1"])
    h1 = jnp.maximum(x1 @ params["w1"] + params["b1"], 0.0)
    ffn = h1 @ params["w2"] + params["b2"]
    return ln(x1 + ffn, params["g2"], params["be2"])


def make_params(key, d_model, d_ff):
    ks = jax.random.split(key, 8)
    scale = 0.1
    return {
        "wq": scale * jax.random.normal(ks[0], (d_model, d_model), jnp.float32),
        "wk": scale * jax.random.normal(ks[1], (d_model, d_model), jnp.float32),
        "wv": scale * jax.random.normal(ks[2], (d_model, d_model), jnp.float32),
        "wo": scale * jax.random.normal(ks[3], (d_model, d_model), jnp.float32),
        "w1": scale * jax.random.normal(ks[4], (d_model, d_ff), jnp.float32),
        "b1": scale * jax.random.normal(ks[5], (1, d_ff), jnp.float32),
        "w2": scale * jax.random.normal(ks[6], (d_ff, d_model), jnp.float32),
        "b2": scale * jax.random.normal(ks[7], (1, d_model), jnp.float32),
        "g1": jnp.ones((1, d_model), jnp.float32),
        "be1": jnp.zeros((1, d_model), jnp.float32),
        "g2": jnp.ones((1, d_model), jnp.float32),
        "be2": jnp.zeros((1, d_model), jnp.float32),
    }


if __name__ == "__main__":
    # NOTE: toy shapes — for real deployments keep D, d_ff multiples of 128 (lane-dense stores).
    B, S, D, H, D_FF = 2, 8, 32, 4, 64
    key = jax.random.PRNGKey(0)
    kx, kp = jax.random.split(key)
    x = jax.random.normal(kx, (B, S, D), jnp.float32)
    params = make_params(kp, D, D_FF)

    out = jax.block_until_ready(encoder_layer(x, params, num_heads=H))
    ref = reference_encoder_layer(x, params, num_heads=H)

    assert out.shape == (B, S, D)
    max_err = jnp.max(jnp.abs(out - ref))
    # f32 matmuls; only the approximate softmax reciprocal differs from the reference.
    assert jnp.allclose(out, ref, atol=2e-2, rtol=2e-2), f"max abs err {max_err}"

    print("KERNEL_OK")
</pallas_src>

<mosaic_0001>
module attributes {stable_mosaic.version = 11 : i64} {
  func.func @encoder_layer_kernel(%arg0: i32, %arg1: memref<1x8x32xf32, #tpu.memory_space<vmem>>, %arg2: memref<32x32xf32, #tpu.memory_space<vmem>>, %arg3: memref<32x32xf32, #tpu.memory_space<vmem>>, %arg4: memref<32x32xf32, #tpu.memory_space<vmem>>, %arg5: memref<32x32xf32, #tpu.memory_space<vmem>>, %arg6: memref<32x64xf32, #tpu.memory_space<vmem>>, %arg7: memref<1x64xf32, #tpu.memory_space<vmem>>, %arg8: memref<64x32xf32, #tpu.memory_space<vmem>>, %arg9: memref<1x32xf32, #tpu.memory_space<vmem>>, %arg10: memref<1x32xf32, #tpu.memory_space<vmem>>, %arg11: memref<1x32xf32, #tpu.memory_space<vmem>>, %arg12: memref<1x32xf32, #tpu.memory_space<vmem>>, %arg13: memref<1x32xf32, #tpu.memory_space<vmem>>, %arg14: memref<1x8x32xf32, #tpu.memory_space<vmem>>, %arg15: memref<8x32xf32, #tpu.memory_space<vmem>>, %arg16: memref<8x32xf32, #tpu.memory_space<vmem>>, %arg17: memref<8x32xf32, #tpu.memory_space<vmem>>, %arg18: memref<8x32xf32, #tpu.memory_space<vmem>>) attributes {dimension_semantics = [#tpu.dimension_semantics<parallel>], iteration_bounds = array<i64: 2>, scalar_prefetch = 0 : i64, scratch_operands = 4 : i64, tpu.core_type = #tpu.core_type<tc>, window_params = [{transform_indices = @transform_0, window_bounds = array<i64: 1, 8, 32>}, {pipeline_mode = #tpu.pipeline_mode<synchronous>, transform_indices = @transform_1, window_bounds = array<i64: 32, 32>}, {pipeline_mode = #tpu.pipeline_mode<synchronous>, transform_indices = @transform_2, window_bounds = array<i64: 32, 32>}, {pipeline_mode = #tpu.pipeline_mode<synchronous>, transform_indices = @transform_3, window_bounds = array<i64: 32, 32>}, {pipeline_mode = #tpu.pipeline_mode<synchronous>, transform_indices = @transform_4, window_bounds = array<i64: 32, 32>}, {pipeline_mode = #tpu.pipeline_mode<synchronous>, transform_indices = @transform_5, window_bounds = array<i64: 32, 64>}, {pipeline_mode = #tpu.pipeline_mode<synchronous>, transform_indices = @transform_6, window_bounds = array<i64: 1, 64>}, {pipeline_mode = #tpu.pipeline_mode<synchronous>, transform_indices = @transform_7, window_bounds = array<i64: 64, 32>}, {pipeline_mode = #tpu.pipeline_mode<synchronous>, transform_indices = @transform_8, window_bounds = array<i64: 1, 32>}, {pipeline_mode = #tpu.pipeline_mode<synchronous>, transform_indices = @transform_9, window_bounds = array<i64: 1, 32>}, {pipeline_mode = #tpu.pipeline_mode<synchronous>, transform_indices = @transform_10, window_bounds = array<i64: 1, 32>}, {pipeline_mode = #tpu.pipeline_mode<synchronous>, transform_indices = @transform_11, window_bounds = array<i64: 1, 32>}, {pipeline_mode = #tpu.pipeline_mode<synchronous>, transform_indices = @transform_12, window_bounds = array<i64: 1, 32>}, {transform_indices = @transform_13, window_bounds = array<i64: 1, 8, 32>}]} {
    %c0 = arith.constant 0 : index
    %c0_0 = arith.constant 0 : index
    %c0_1 = arith.constant 0 : index
    %0 = vector.load %arg1[%c0, %c0_0, %c0_1] : memref<1x8x32xf32, #tpu.memory_space<vmem>>, vector<1x8x32xf32>
    %1 = vector.shape_cast %0 : vector<1x8x32xf32> to vector<8x32xf32>
    %c0_2 = arith.constant 0 : index
    %c0_3 = arith.constant 0 : index
    %2 = vector.load %arg2[%c0_2, %c0_3] : memref<32x32xf32, #tpu.memory_space<vmem>>, vector<32x32xf32>
    %cst = arith.constant dense<0.000000e+00> : vector<8x32xf32>
    %3 = tpu.matmul %1, %2, %cst {dimension_numbers = #tpu.dot_dimension_numbers<[1], [0], [0], [1], [0, 0, 1, 1], [], []>} : vector<8x32xf32>, vector<32x32xf32>, vector<8x32xf32> -> vector<8x32xf32>
    %c0_4 = arith.constant 0 : index
    %c0_5 = arith.constant 0 : index
    %4 = vector.load %arg15[%c0_4, %c0_5] : memref<8x32xf32, #tpu.memory_space<vmem>>, vector<8x32xf32>
    tpu.vector_store %arg15[%c0_4, %c0_5], %3 {strides = array<i32>} : memref<8x32xf32, #tpu.memory_space<vmem>>, vector<8x32xf32>,
    %c0_6 = arith.constant 0 : index
    %c0_7 = arith.constant 0 : index
    %5 = vector.load %arg3[%c0_6, %c0_7] : memref<32x32xf32, #tpu.memory_space<vmem>>, vector<32x32xf32>
    %cst_8 = arith.constant dense<0.000000e+00> : vector<8x32xf32>
    %6 = tpu.matmul %1, %5, %cst_8 {dimension_numbers = #tpu.dot_dimension_numbers<[1], [0], [0], [1], [0, 0, 1, 1], [], []>} : vector<8x32xf32>, vector<32x32xf32>, vector<8x32xf32> -> vector<8x32xf32>
    %c0_9 = arith.constant 0 : index
    %c0_10 = arith.constant 0 : index
    %7 = vector.load %arg16[%c0_9, %c0_10] : memref<8x32xf32, #tpu.memory_space<vmem>>, vector<8x32xf32>
    tpu.vector_store %arg16[%c0_9, %c0_10], %6 {strides = array<i32>} : memref<8x32xf32, #tpu.memory_space<vmem>>, vector<8x32xf32>,
    %c0_11 = arith.constant 0 : index
    %c0_12 = arith.constant 0 : index
    %8 = vector.load %arg4[%c0_11, %c0_12] : memref<32x32xf32, #tpu.memory_space<vmem>>, vector<32x32xf32>
    %cst_13 = arith.constant dense<0.000000e+00> : vector<8x32xf32>
    %9 = tpu.matmul %1, %8, %cst_13 {dimension_numbers = #tpu.dot_dimension_numbers<[1], [0], [0], [1], [0, 0, 1, 1], [], []>} : vector<8x32xf32>, vector<32x32xf32>, vector<8x32xf32> -> vector<8x32xf32>
    %c0_14 = arith.constant 0 : index
    %c0_15 = arith.constant 0 : index
    %10 = vector.load %arg17[%c0_14, %c0_15] : memref<8x32xf32, #tpu.memory_space<vmem>>, vector<8x32xf32>
    tpu.vector_store %arg17[%c0_14, %c0_15], %9 {strides = array<i32>} : memref<8x32xf32, #tpu.memory_space<vmem>>, vector<8x32xf32>,
    %c0_i32 = arith.constant 0 : i32
    %c8_i32 = arith.constant 8 : i32
    %11 = arith.muli %c0_i32, %c8_i32 : i32
    %12 = tpu.assume_multiple %11, 8 : i32
    %13 = arith.index_cast %12 : i32 to index
    %c0_16 = arith.constant 0 : index
    %14 = vector.load %arg15[%13, %c0_16] : memref<8x32xf32, #tpu.memory_space<vmem>>, vector<8x8xf32>
    %15 = arith.index_cast %12 : i32 to index
    %c0_17 = arith.constant 0 : index
    %16 = vector.load %arg16[%15, %c0_17] : memref<8x32xf32, #tpu.memory_space<vmem>>, vector<8x8xf32>
    %17 = arith.index_cast %12 : i32 to index
    %c0_18 = arith.constant 0 : index
    %18 = vector.load %arg17[%17, %c0_18] : memref<8x32xf32, #tpu.memory_space<vmem>>, vector<8x8xf32>
    %cst_19 = arith.constant dense<0.000000e+00> : vector<8x8xf32>
    %19 = tpu.matmul %14, %16, %cst_19 {dimension_numbers = #tpu.dot_dimension_numbers<[1], [1], [0], [0], [0, 0, 1, 0], [], []>} : vector<8x8xf32>, vector<8x8xf32>, vector<8x8xf32> -> vector<8x8xf32>
    %cst_20 = arith.constant dense<0xFF800000> : vector<8xf32>
    %20 = vector.multi_reduction <maximumf>, %19, %cst_20 [1] : vector<8x8xf32> to vector<8xf32>
    %21 = vector.shape_cast %20 : vector<8xf32> to vector<8x1xf32>
    %22 = vector.broadcast %21 : vector<8x1xf32> to vector<8x8xf32>
    %23 = arith.subf %19, %22 : vector<8x8xf32>
    %24 = math.exp %23 : vector<8x8xf32>
    %cst_21 = arith.constant dense<0.000000e+00> : vector<8xf32>
    %25 = vector.multi_reduction <add>, %24, %cst_21 [1] : vector<8x8xf32> to vector<8xf32>
    %26 = vector.shape_cast %25 : vector<8xf32> to vector<8x1xf32>
    %27 = tpu.reciprocal %26 {approx = true} : vector<8x1xf32> -> vector<8x1xf32>
    %28 = vector.broadcast %27 : vector<8x1xf32> to vector<8x8xf32>
    %29 = arith.mulf %24, %28 : vector<8x8xf32>
    %cst_22 = arith.constant dense<0.000000e+00> : vector<8x8xf32>
    %30 = tpu.matmul %29, %18, %cst_22 {dimension_numbers = #tpu.dot_dimension_numbers<[1], [0], [0], [1], [0, 0, 1, 1], [], []>} : vector<8x8xf32>, vector<8x8xf32>, vector<8x8xf32> -> vector<8x8xf32>
    %31 = arith.index_cast %12 : i32 to index
    %c0_23 = arith.constant 0 : index
    %32 = vector.load %arg18[%31, %c0_23] : memref<8x32xf32, #tpu.memory_space<vmem>>, vector<8x8xf32>
    tpu.vector_store %arg18[%31, %c0_23], %30 {strides = array<i32>} : memref<8x32xf32, #tpu.memory_space<vmem>>, vector<8x8xf32>,
    %33 = arith.index_cast %12 : i32 to index
    %c8 = arith.constant 8 : index
    %34 = vector.load %arg15[%33, %c8] : memref<8x32xf32, #tpu.memory_space<vmem>>, vector<8x8xf32>
    %35 = arith.index_cast %12 : i32 to index
    %c8_24 = arith.constant 8 : index
    %36 = vector.load %arg16[%35, %c8_24] : memref<8x32xf32, #tpu.memory_space<vmem>>, vector<8x8xf32>
    %37 = arith.index_cast %12 : i32 to index
    %c8_25 = arith.constant 8 : index
    %38 = vector.load %arg17[%37, %c8_25] : memref<8x32xf32, #tpu.memory_space<vmem>>, vector<8x8xf32>
    %cst_26 = arith.constant dense<0.000000e+00> : vector<8x8xf32>
    %39 = tpu.matmul %34, %36, %cst_26 {dimension_numbers = #tpu.dot_dimension_numbers<[1], [1], [0], [0], [0, 0, 1, 0], [], []>} : vector<8x8xf32>, vector<8x8xf32>, vector<8x8xf32> -> vector<8x8xf32>
    %cst_27 = arith.constant dense<0xFF800000> : vector<8xf32>
    %40 = vector.multi_reduction <maximumf>, %39, %cst_27 [1] : vector<8x8xf32> to vector<8xf32>
    %41 = vector.shape_cast %40 : vector<8xf32> to vector<8x1xf32>
    %42 = vector.broadcast %41 : vector<8x1xf32> to vector<8x8xf32>
    %43 = arith.subf %39, %42 : vector<8x8xf32>
    %44 = math.exp %43 : vector<8x8xf32>
    %cst_28 = arith.constant dense<0.000000e+00> : vector<8xf32>
    %45 = vector.multi_reduction <add>, %44, %cst_28 [1] : vector<8x8xf32> to vector<8xf32>
    %46 = vector.shape_cast %45 : vector<8xf32> to vector<8x1xf32>
    %47 = tpu.reciprocal %46 {approx = true} : vector<8x1xf32> -> vector<8x1xf32>
    %48 = vector.broadcast %47 : vector<8x1xf32> to vector<8x8xf32>
    %49 = arith.mulf %44, %48 : vector<8x8xf32>
    %cst_29 = arith.constant dense<0.000000e+00> : vector<8x8xf32>
    %50 = tpu.matmul %49, %38, %cst_29 {dimension_numbers = #tpu.dot_dimension_numbers<[1], [0], [0], [1], [0, 0, 1, 1], [], []>} : vector<8x8xf32>, vector<8x8xf32>, vector<8x8xf32> -> vector<8x8xf32>
    %51 = arith.index_cast %12 : i32 to index
    %c8_30 = arith.constant 8 : index
    %52 = vector.load %arg18[%51, %c8_30] : memref<8x32xf32, #tpu.memory_space<vmem>>, vector<8x8xf32>
    tpu.vector_store %arg18[%51, %c8_30], %50 {strides = array<i32>} : memref<8x32xf32, #tpu.memory_space<vmem>>, vector<8x8xf32>,
    %53 = arith.index_cast %12 : i32 to index
    %c16 = arith.constant 16 : index
    %54 = vector.load %arg15[%53, %c16] : memref<8x32xf32, #tpu.memory_space<vmem>>, vector<8x8xf32>
    %55 = arith.index_cast %12 : i32 to index
    %c16_31 = arith.constant 16 : index
    %56 = vector.load %arg16[%55, %c16_31] : memref<8x32xf32, #tpu.memory_space<vmem>>, vector<8x8xf32>
    %57 = arith.index_cast %12 : i32 to index
    %c16_32 = arith.constant 16 : index
    %58 = vector.load %arg17[%57, %c16_32] : memref<8x32xf32, #tpu.memory_space<vmem>>, vector<8x8xf32>
    %cst_33 = arith.constant dense<0.000000e+00> : vector<8x8xf32>
    %59 = tpu.matmul %54, %56, %cst_33 {dimension_numbers = #tpu.dot_dimension_numbers<[1], [1], [0], [0], [0, 0, 1, 0], [], []>} : vector<8x8xf32>, vector<8x8xf32>, vector<8x8xf32> -> vector<8x8xf32>
    %cst_34 = arith.constant dense<0xFF800000> : vector<8xf32>
    %60 = vector.multi_reduction <maximumf>, %59, %cst_34 [1] : vector<8x8xf32> to vector<8xf32>
    %61 = vector.shape_cast %60 : vector<8xf32> to vector<8x1xf32>
    %62 = vector.broadcast %61 : vector<8x1xf32> to vector<8x8xf32>
    %63 = arith.subf %59, %62 : vector<8x8xf32>
    %64 = math.exp %63 : vector<8x8xf32>
    %cst_35 = arith.constant dense<0.000000e+00> : vector<8xf32>
    %65 = vector.multi_reduction <add>, %64, %cst_35 [1] : vector<8x8xf32> to vector<8xf32>
    %66 = vector.shape_cast %65 : vector<8xf32> to vector<8x1xf32>
    %67 = tpu.reciprocal %66 {approx = true} : vector<8x1xf32> -> vector<8x1xf32>
    %68 = vector.broadcast %67 : vector<8x1xf32> to vector<8x8xf32>
    %69 = arith.mulf %64, %68 : vector<8x8xf32>
    %cst_36 = arith.constant dense<0.000000e+00> : vector<8x8xf32>
    %70 = tpu.matmul %69, %58, %cst_36 {dimension_numbers = #tpu.dot_dimension_numbers<[1], [0], [0], [1], [0, 0, 1, 1], [], []>} : vector<8x8xf32>, vector<8x8xf32>, vector<8x8xf32> -> vector<8x8xf32>
    %71 = arith.index_cast %12 : i32 to index
    %c16_37 = arith.constant 16 : index
    %72 = vector.load %arg18[%71, %c16_37] : memref<8x32xf32, #tpu.memory_space<vmem>>, vector<8x8xf32>
    tpu.vector_store %arg18[%71, %c16_37], %70 {strides = array<i32>} : memref<8x32xf32, #tpu.memory_space<vmem>>, vector<8x8xf32>,
    %73 = arith.index_cast %12 : i32 to index
    %c24 = arith.constant 24 : index
    %74 = vector.load %arg15[%73, %c24] : memref<8x32xf32, #tpu.memory_space<vmem>>, vector<8x8xf32>
    %75 = arith.index_cast %12 : i32 to index
    %c24_38 = arith.constant 24 : index
    %76 = vector.load %arg16[%75, %c24_38] : memref<8x32xf32, #tpu.memory_space<vmem>>, vector<8x8xf32>
    %77 = arith.index_cast %12 : i32 to index
    %c24_39 = arith.constant 24 : index
    %78 = vector.load %arg17[%77, %c24_39] : memref<8x32xf32, #tpu.memory_space<vmem>>, vector<8x8xf32>
    %cst_40 = arith.constant dense<0.000000e+00> : vector<8x8xf32>
    %79 = tpu.matmul %74, %76, %cst_40 {dimension_numbers = #tpu.dot_dimension_numbers<[1], [1], [0], [0], [0, 0, 1, 0], [], []>} : vector<8x8xf32>, vector<8x8xf32>, vector<8x8xf32> -> vector<8x8xf32>
    %cst_41 = arith.constant dense<0xFF800000> : vector<8xf32>
    %80 = vector.multi_reduction <maximumf>, %79, %cst_41 [1] : vector<8x8xf32> to vector<8xf32>
    %81 = vector.shape_cast %80 : vector<8xf32> to vector<8x1xf32>
    %82 = vector.broadcast %81 : vector<8x1xf32> to vector<8x8xf32>
    %83 = arith.subf %79, %82 : vector<8x8xf32>
    %84 = math.exp %83 : vector<8x8xf32>
    %cst_42 = arith.constant dense<0.000000e+00> : vector<8xf32>
    %85 = vector.multi_reduction <add>, %84, %cst_42 [1] : vector<8x8xf32> to vector<8xf32>
    %86 = vector.shape_cast %85 : vector<8xf32> to vector<8x1xf32>
    %87 = tpu.reciprocal %86 {approx = true} : vector<8x1xf32> -> vector<8x1xf32>
    %88 = vector.broadcast %87 : vector<8x1xf32> to vector<8x8xf32>
    %89 = arith.mulf %84, %88 : vector<8x8xf32>
    %cst_43 = arith.constant dense<0.000000e+00> : vector<8x8xf32>
    %90 = tpu.matmul %89, %78, %cst_43 {dimension_numbers = #tpu.dot_dimension_numbers<[1], [0], [0], [1], [0, 0, 1, 1], [], []>} : vector<8x8xf32>, vector<8x8xf32>, vector<8x8xf32> -> vector<8x8xf32>
    %91 = arith.index_cast %12 : i32 to index
    %c24_44 = arith.constant 24 : index
    %92 = vector.load %arg18[%91, %c24_44] : memref<8x32xf32, #tpu.memory_space<vmem>>, vector<8x8xf32>
    tpu.vector_store %arg18[%91, %c24_44], %90 {strides = array<i32>} : memref<8x32xf32, #tpu.memory_space<vmem>>, vector<8x8xf32>,
    %c1_i32 = arith.constant 1 : i32
    %c0_45 = arith.constant 0 : index
    %c0_46 = arith.constant 0 : index
    %93 = vector.load %arg18[%c0_45, %c0_46] : memref<8x32xf32, #tpu.memory_space<vmem>>, vector<8x32xf32>
    %c0_47 = arith.constant 0 : index
    %c0_48 = arith.constant 0 : index
    %94 = vector.load %arg5[%c0_47, %c0_48] : memref<32x32xf32, #tpu.memory_space<vmem>>, vector<32x32xf32>
    %cst_49 = arith.constant dense<0.000000e+00> : vector<8x32xf32>
    %95 = tpu.matmul %93, %94, %cst_49 {dimension_numbers = #tpu.dot_dimension_numbers<[1], [0], [0], [1], [0, 0, 1, 1], [], []>} : vector<8x32xf32>, vector<32x32xf32>, vector<8x32xf32> -> vector<8x32xf32>
    %96 = arith.addf %1, %95 : vector<8x32xf32>
    %c0_50 = arith.constant 0 : index
    %c0_51 = arith.constant 0 : index
    %97 = vector.load %arg10[%c0_50, %c0_51] : memref<1x32xf32, #tpu.memory_space<vmem>>, vector<1x32xf32>
    %c0_52 = arith.constant 0 : index
    %c0_53 = arith.constant 0 : index
    %98 = vector.load %arg11[%c0_52, %c0_53] : memref<1x32xf32, #tpu.memory_space<vmem>>, vector<1x32xf32>
    %cst_54 = arith.constant dense<0.000000e+00> : vector<8xf32>
    %99 = vector.multi_reduction <add>, %96, %cst_54 [1] : vector<8x32xf32> to vector<8xf32>
    %100 = vector.shape_cast %99 : vector<8xf32> to vector<8x1xf32>
    %cst_55 = arith.constant 3.200000e+01 : f32
    %101 = vector.broadcast %cst_55 : f32 to vector<8x1xf32>
    %102 = arith.divf %100, %101 : vector<8x1xf32>
    %103 = vector.broadcast %102 : vector<8x1xf32> to vector<8x32xf32>
    %104 = arith.subf %96, %103 : vector<8x32xf32>
    %105 = arith.mulf %104, %104 : vector<8x32xf32>
    %cst_56 = arith.constant dense<0.000000e+00> : vector<8xf32>
    %106 = vector.multi_reduction <add>, %105, %cst_56 [1] : vector<8x32xf32> to vector<8xf32>
    %107 = vector.shape_cast %106 : vector<8xf32> to vector<8x1xf32>
    %cst_57 = arith.constant 3.200000e+01 : f32
    %108 = vector.broadcast %cst_57 : f32 to vector<8x1xf32>
    %109 = arith.divf %107, %108 : vector<8x1xf32>
    %110 = vector.broadcast %102 : vector<8x1xf32> to vector<8x32xf32>
    %111 = arith.subf %96, %110 : vector<8x32xf32>
    %cst_58 = arith.constant 9.99999974E-6 : f32
    %112 = vector.broadcast %cst_58 : f32 to vector<8x1xf32>
    %113 = arith.addf %109, %112 : vector<8x1xf32>
    %114 = math.rsqrt %113 : vector<8x1xf32>
    %115 = vector.broadcast %114 : vector<8x1xf32> to vector<8x32xf32>
    %116 = arith.mulf %111, %115 : vector<8x32xf32>
    %117 = vector.broadcast %97 : vector<1x32xf32> to vector<8x32xf32>
    %118 = arith.mulf %116, %117 : vector<8x32xf32>
    %119 = vector.broadcast %98 : vector<1x32xf32> to vector<8x32xf32>
    %120 = arith.addf %118, %119 : vector<8x32xf32>
    %c0_59 = arith.constant 0 : index
    %c0_60 = arith.constant 0 : index
    %121 = vector.load %arg6[%c0_59, %c0_60] : memref<32x64xf32, #tpu.memory_space<vmem>>, vector<32x64xf32>
    %cst_61 = arith.constant dense<0.000000e+00> : vector<8x64xf32>
    %122 = tpu.matmul %120, %121, %cst_61 {dimension_numbers = #tpu.dot_dimension_numbers<[1], [0], [0], [1], [0, 0, 1, 1], [], []>} : vector<8x32xf32>, vector<32x64xf32>, vector<8x64xf32> -> vector<8x64xf32>
    %c0_62 = arith.constant 0 : index
    %c0_63 = arith.constant 0 : index
    %123 = vector.load %arg7[%c0_62, %c0_63] : memref<1x64xf32, #tpu.memory_space<vmem>>, vector<1x64xf32>
    %124 = vector.broadcast %123 : vector<1x64xf32> to vector<8x64xf32>
    %125 = arith.addf %122, %124 : vector<8x64xf32>
    %cst_64 = arith.constant 0.000000e+00 : f32
    %126 = vector.broadcast %cst_64 : f32 to vector<8x64xf32>
    %127 = arith.maximumf %125, %126 : vector<8x64xf32>
    %c0_65 = arith.constant 0 : index
    %c0_66 = arith.constant 0 : index
    %128 = vector.load %arg8[%c0_65, %c0_66] : memref<64x32xf32, #tpu.memory_space<vmem>>, vector<64x32xf32>
    %cst_67 = arith.constant dense<0.000000e+00> : vector<8x32xf32>
    %129 = tpu.matmul %127, %128, %cst_67 {dimension_numbers = #tpu.dot_dimension_numbers<[1], [0], [0], [1], [0, 0, 1, 1], [], []>} : vector<8x64xf32>, vector<64x32xf32>, vector<8x32xf32> -> vector<8x32xf32>
    %c0_68 = arith.constant 0 : index
    %c0_69 = arith.constant 0 : index
    %130 = vector.load %arg9[%c0_68, %c0_69] : memref<1x32xf32, #tpu.memory_space<vmem>>, vector<1x32xf32>
    %131 = vector.broadcast %130 : vector<1x32xf32> to vector<8x32xf32>
    %132 = arith.addf %129, %131 : vector<8x32xf32>
    %133 = arith.addf %120, %132 : vector<8x32xf32>
    %c0_70 = arith.constant 0 : index
    %c0_71 = arith.constant 0 : index
    %134 = vector.load %arg12[%c0_70, %c0_71] : memref<1x32xf32, #tpu.memory_space<vmem>>, vector<1x32xf32>
    %c0_72 = arith.constant 0 : index
    %c0_73 = arith.constant 0 : index
    %135 = vector.load %arg13[%c0_72, %c0_73] : memref<1x32xf32, #tpu.memory_space<vmem>>, vector<1x32xf32>
    %cst_74 = arith.constant dense<0.000000e+00> : vector<8xf32>
    %136 = vector.multi_reduction <add>, %133, %cst_74 [1] : vector<8x32xf32> to vector<8xf32>
    %137 = vector.shape_cast %136 : vector<8xf32> to vector<8x1xf32>
    %cst_75 = arith.constant 3.200000e+01 : f32
    %138 = vector.broadcast %cst_75 : f32 to vector<8x1xf32>
    %139 = arith.divf %137, %138 : vector<8x1xf32>
    %140 = vector.broadcast %139 : vector<8x1xf32> to vector<8x32xf32>
    %141 = arith.subf %133, %140 : vector<8x32xf32>
    %142 = arith.mulf %141, %141 : vector<8x32xf32>
    %cst_76 = arith.constant dense<0.000000e+00> : vector<8xf32>
    %143 = vector.multi_reduction <add>, %142, %cst_76 [1] : vector<8x32xf32> to vector<8xf32>
    %144 = vector.shape_cast %143 : vector<8xf32> to vector<8x1xf32>
    %cst_77 = arith.constant 3.200000e+01 : f32
    %145 = vector.broadcast %cst_77 : f32 to vector<8x1xf32>
    %146 = arith.divf %144, %145 : vector<8x1xf32>
    %147 = vector.broadcast %139 : vector<8x1xf32> to vector<8x32xf32>
    %148 = arith.subf %133, %147 : vector<8x32xf32>
    %cst_78 = arith.constant 9.99999974E-6 : f32
    %149 = vector.broadcast %cst_78 : f32 to vector<8x1xf32>
    %150 = arith.addf %146, %149 : vector<8x1xf32>
    %151 = math.rsqrt %150 : vector<8x1xf32>
    %152 = vector.broadcast %151 : vector<8x1xf32> to vector<8x32xf32>
    %153 = arith.mulf %148, %152 : vector<8x32xf32>
    %154 = vector.broadcast %134 : vector<1x32xf32> to vector<8x32xf32>
    %155 = arith.mulf %153, %154 : vector<8x32xf32>
    %156 = vector.broadcast %135 : vector<1x32xf32> to vector<8x32xf32>
    %157 = arith.addf %155, %156 : vector<8x32xf32>
    %158 = vector.shape_cast %157 : vector<8x32xf32> to vector<1x8x32xf32>
    %c0_79 = arith.constant 0 : index
    %c0_80 = arith.constant 0 : index
    %c0_81 = arith.constant 0 : index
    %159 = vector.load %arg14[%c0_79, %c0_80, %c0_81] : memref<1x8x32xf32, #tpu.memory_space<vmem>>, vector<1x8x32xf32>
    tpu.vector_store %arg14[%c0_79, %c0_80, %c0_81], %158 {strides = array<i32>} : memref<1x8x32xf32, #tpu.memory_space<vmem>>, vector<1x8x32xf32>,
    return
  }
  func.func @transform_0(%arg0: i32) -> (i32, i32, i32) {
    %c0_i32 = arith.constant 0 : i32
    %c0_i32_0 = arith.constant 0 : i32
    %c0_i32_1 = arith.constant 0 : i32
    return %arg0, %c0_i32, %c0_i32_0 : i32, i32, i32
  }
  func.func @transform_1(%arg0: i32) -> (i32, i32) {
    %c0_i32 = arith.constant 0 : i32
    %c0_i32_0 = arith.constant 0 : i32
    %c0_i32_1 = arith.constant 0 : i32
    return %c0_i32, %c0_i32_0 : i32, i32
  }
  func.func @transform_2(%arg0: i32) -> (i32, i32) {
    %c0_i32 = arith.constant 0 : i32
    %c0_i32_0 = arith.constant 0 : i32
    %c0_i32_1 = arith.constant 0 : i32
    return %c0_i32, %c0_i32_0 : i32, i32
  }
  func.func @transform_3(%arg0: i32) -> (i32, i32) {
    %c0_i32 = arith.constant 0 : i32
    %c0_i32_0 = arith.constant 0 : i32
    %c0_i32_1 = arith.constant 0 : i32
    return %c0_i32, %c0_i32_0 : i32, i32
  }
  func.func @transform_4(%arg0: i32) -> (i32, i32) {
    %c0_i32 = arith.constant 0 : i32
    %c0_i32_0 = arith.constant 0 : i32
    %c0_i32_1 = arith.constant 0 : i32
    return %c0_i32, %c0_i32_0 : i32, i32
  }
  func.func @transform_5(%arg0: i32) -> (i32, i32) {
    %c0_i32 = arith.constant 0 : i32
    %c0_i32_0 = arith.constant 0 : i32
    %c0_i32_1 = arith.constant 0 : i32
    return %c0_i32, %c0_i32_0 : i32, i32
  }
  func.func @transform_6(%arg0: i32) -> (i32, i32) {
    %c0_i32 = arith.constant 0 : i32
    %c0_i32_0 = arith.constant 0 : i32
    %c0_i32_1 = arith.constant 0 : i32
    return %c0_i32, %c0_i32_0 : i32, i32
  }
  func.func @transform_7(%arg0: i32) -> (i32, i32) {
    %c0_i32 = arith.constant 0 : i32
    %c0_i32_0 = arith.constant 0 : i32
    %c0_i32_1 = arith.constant 0 : i32
    return %c0_i32, %c0_i32_0 : i32, i32
  }
  func.func @transform_8(%arg0: i32) -> (i32, i32) {
    %c0_i32 = arith.constant 0 : i32
    %c0_i32_0 = arith.constant 0 : i32
    %c0_i32_1 = arith.constant 0 : i32
    return %c0_i32, %c0_i32_0 : i32, i32
  }
  func.func @transform_9(%arg0: i32) -> (i32, i32) {
    %c0_i32 = arith.constant 0 : i32
    %c0_i32_0 = arith.constant 0 : i32
    %c0_i32_1 = arith.constant 0 : i32
    return %c0_i32, %c0_i32_0 : i32, i32
  }
  func.func @transform_10(%arg0: i32) -> (i32, i32) {
    %c0_i32 = arith.constant 0 : i32
    %c0_i32_0 = arith.constant 0 : i32
    %c0_i32_1 = arith.constant 0 : i32
    return %c0_i32, %c0_i32_0 : i32, i32
  }
  func.func @transform_11(%arg0: i32) -> (i32, i32) {
    %c0_i32 = arith.constant 0 : i32
    %c0_i32_0 = arith.constant 0 : i32
    %c0_i32_1 = arith.constant 0 : i32
    return %c0_i32, %c0_i32_0 : i32, i32
  }
  func.func @transform_12(%arg0: i32) -> (i32, i32) {
    %c0_i32 = arith.constant 0 : i32
    %c0_i32_0 = arith.constant 0 : i32
    %c0_i32_1 = arith.constant 0 : i32
    return %c0_i32, %c0_i32_0 : i32, i32
  }
  func.func @transform_13(%arg0: i32) -> (i32, i32, i32) {
    %c0_i32 = arith.constant 0 : i32
    %c0_i32_0 = arith.constant 0 : i32
    %c0_i32_1 = arith.constant 0 : i32
    return %arg0, %c0_i32, %c0_i32_0 : i32, i32, i32
  }
}

</mosaic_0001>

<llo_original>
// kernel: tpu_custom_call.1
$region0: #{tpu_custom_call.1}
  #allocation0 [shape = 'u32[]', space=smem, size = 0x4, offset = 0x4, fixed_abs, tag = 'smem constant byte address 0x4 - core index']
  #allocation1 [shape = 'u32[144,128]{1,0:T(1,128)}', space=vmem, size = 0x12000, scoped, tag = 'internal scratch']
  #allocation2 [shape = 'f32[8,32]{1,0:T(8,128)}', space=vmem, size = 0x1000, scoped, tag = 'scratch operand']
  #allocation3 [shape = 'f32[8,32]{1,0:T(8,128)}', space=vmem, size = 0x1000, scoped, tag = 'scratch operand']
  #allocation4 [shape = 'f32[8,32]{1,0:T(8,128)}', space=vmem, size = 0x1000, scoped, tag = 'scratch operand']
  #allocation5 [shape = 'f32[8,32]{1,0:T(8,128)}', space=vmem, size = 0x1000, scoped, tag = 'scratch operand']
  %s0 = inlined_call_operand.hbm [shape: f32[2,8,32], index: 0, kind: input, shape index: {}]
  %s1 = inlined_call_operand.hbm [shape: f32[32,32], index: 1, kind: input, shape index: {}]
  %s2 = inlined_call_operand.hbm [shape: f32[32,32], index: 2, kind: input, shape index: {}]
  %s3 = inlined_call_operand.hbm [shape: f32[32,32], index: 3, kind: input, shape index: {}]
  %s4 = inlined_call_operand.hbm [shape: f32[32,32], index: 4, kind: input, shape index: {}]
  %s5 = inlined_call_operand.hbm [shape: f32[32,64], index: 5, kind: input, shape index: {}]
  %s6 = inlined_call_operand.hbm [shape: f32[1,64], index: 6, kind: input, shape index: {}]
  %s7 = inlined_call_operand.hbm [shape: f32[64,32], index: 7, kind: input, shape index: {}]
  %s8 = inlined_call_operand.hbm [shape: f32[1,32], index: 8, kind: input, shape index: {}]
  %s9 = inlined_call_operand.hbm [shape: f32[1,32], index: 9, kind: input, shape index: {}]
  %s10 = inlined_call_operand.hbm [shape: f32[1,32], index: 10, kind: input, shape index: {}]
  %s11 = inlined_call_operand.hbm [shape: f32[1,32], index: 11, kind: input, shape index: {}]
  %s12 = inlined_call_operand.hbm [shape: f32[1,32], index: 12, kind: input, shape index: {}]
  %s13 = inlined_call_operand.hbm [shape: f32[2,8,32], index: 13, kind: output, shape index: {}]
  %s14 = sld [smem:[#allocation0]]
  $region137: #{tpu_custom_call.1} parent=0
    _
  %s16 = ssub.s32 1, %s14
  %s17 = scalar_select 0, %s16, %s14
  $region1: #{tpu_custom_call.1} parent=0
    #allocation6 [shape = 'u8[8192]{0}', space=vmem, size = 0x2000, scoped, tag = 'input window, operand 0']
    #allocation7 [shape = 's32[2]{0}', space=sflag, size = 0x8, scoped, tag = 'scoped memory for tpu_custom_call.1']
    #allocation8 [shape = 's32[2]{0}', space=sflag, size = 0x8, scoped, tag = 'scoped memory for tpu_custom_call.1']
    #allocation9 [shape = 'u8[16384]{0}', space=vmem, size = 0x4000, scoped, tag = 'input window, operand 1, single buffered']
    #allocation10 [shape = 's32[1]{0}', space=sflag, size = 0x4, scoped, tag = 'scoped memory for tpu_custom_call.1']
    #allocation11 [shape = 'u8[16384]{0}', space=vmem, size = 0x4000, scoped, tag = 'input window, operand 2, single buffered']
    #allocation12 [shape = 'u8[16384]{0}', space=vmem, size = 0x4000, scoped, tag = 'input window, operand 3, single buffered']
    #allocation13 [shape = 's32[1]{0}', space=sflag, size = 0x4, scoped, tag = 'scoped memory for tpu_custom_call.1']
    #allocation14 [shape = 'u8[16384]{0}', space=vmem, size = 0x4000, scoped, tag = 'input window, operand 4, single buffered']
    #allocation15 [shape = 'u8[16384]{0}', space=vmem, size = 0x4000, scoped, tag = 'input window, operand 5, single buffered']
    #allocation16 [shape = 's32[1]{0}', space=sflag, size = 0x4, scoped, tag = 'scoped memory for tpu_custom_call.1']
    #allocation17 [shape = 'u8[512]{0}', space=vmem, size = 0x400, scoped, tag = 'input window, operand 6, single buffered']
    #allocation18 [shape = 'u8[32768]{0}', space=vmem, size = 0x8000, scoped, tag = 'input window, operand 7, single buffered']
    #allocation19 [shape = 's32[1]{0}', space=sflag, size = 0x4, scoped, tag = 'scoped memory for tpu_custom_call.1']
    #allocation20 [shape = 'u8[512]{0}', space=vmem, size = 0x400, scoped, tag = 'input window, operand 8, single buffered']
    #allocation21 [shape = 'u8[512]{0}', space=vmem, size = 0x400, scoped, tag = 'input window, operand 9, single buffered']
    #allocation22 [shape = 's32[1]{0}', space=sflag, size = 0x4, scoped, tag = 'scoped memory for tpu_custom_call.1']
    #allocation23 [shape = 'u8[512]{0}', space=vmem, size = 0x400, scoped, tag = 'input window, operand 10, single buffered']
    #allocation24 [shape = 'u8[512]{0}', space=vmem, size = 0x400, scoped, tag = 'input window, operand 11, single buffered']
    #allocation25 [shape = 's32[1]{0}', space=sflag, size = 0x4, scoped, tag = 'scoped memory for tpu_custom_call.1']
    #allocation26 [shape = 'u8[512]{0}', space=vmem, size = 0x400, scoped, tag = 'input window, operand 12, single buffered']
    #allocation27 [shape = 'u8[8192]{0}', space=vmem, size = 0x2000, scoped, tag = 'output window, operand 0']
    %18 = vsyncpa [#allocation7], 0
    %s19 = scalar_lea.sflag [#allocation7], 1
    %20 = vsyncpa %s19, 0
    %21 = vsyncpa [#allocation10], 0
    %22 = vsyncpa [#allocation13], 0
    %23 = vsyncpa [#allocation16], 0
    %24 = vsyncpa [#allocation19], 0
    %25 = vsyncpa [#allocation22], 0
    %26 = vsyncpa [#allocation25], 0
    %27 = vsyncpa [#allocation8], 0
    %s28 = scalar_lea.sflag [#allocation8], 1
    %29 = vsyncpa %s28, 0
    loop: start=0, step=1, limit=4
    $region2: #{tpu_custom_call.1} parent=1 // loop_pre_header
      _
    $region3: #{tpu_custom_call.1} parent=1 // loop_header
      %s31 = sphi 0, %s35
      %p32 = scmp.ge.s32.totalorder %s31, 4
      %s41 = sphi 0, %s43
      %s44 = sphi 0, %s41
      %s45 = sphi 0, %s44
      %s61 = sphi 0, %s45
      %s65 = sphi 0, %s65
      %s67 = sphi 0, %s65
      %s68 = sphi 0, %s67
      %s82 = sphi 0, %s68
      %s86 = sphi 0, %s86
      %s88 = sphi 0, %s86
      %s89 = sphi 0, %s88
      %s103 = sphi 0, %s89
      %s107 = sphi 0, %s107
      %s109 = sphi 0, %s107
      %s110 = sphi 0, %s109
      %s124 = sphi 0, %s110
      %s128 = sphi 0, %s128
      %s130 = sphi 0, %s128
      %s131 = sphi 0, %s130
      %s145 = sphi 0, %s131
      %s149 = sphi 0, %s149
      %s151 = sphi 0, %s149
      %s152 = sphi 0, %s151
      %s166 = sphi 0, %s152
      %s170 = sphi 0, %s170
      %s172 = sphi 0, %s170
      %s173 = sphi 0, %s172
      %s187 = sphi 0, %s173
      %s191 = sphi 0, %s191
      %s193 = sphi 0, %s191
      %s194 = sphi 0, %s193
      %s208 = sphi 0, %s194
      %s212 = sphi 0, %s212
      %s214 = sphi 0, %s212
      %s215 = sphi 0, %s214
      %s229 = sphi 0, %s215
      %s233 = sphi 0, %s233
      %s235 = sphi 0, %s233
      %s236 = sphi 0, %s235
      %s250 = sphi 0, %s236
      %s254 = sphi 0, %s254
      %s256 = sphi 0, %s254
      %s257 = sphi 0, %s256
      %s271 = sphi 0, %s257
      %s275 = sphi 0, %s275
      %s277 = sphi 0, %s275
      %s278 = sphi 0, %s277
      %s292 = sphi 0, %s278
      %s296 = sphi 0, %s296
      %s298 = sphi 0, %s296
      %s299 = sphi 0, %s298
      %s313 = sphi 0, %s299
      %s319 = sphi 0, %s321
      %s322 = sphi 0, %s319
      %s323 = sphi 0, %s322
      %s339 = sphi 0, %s323
    $region4: #{tpu_custom_call.1} parent=1 // loop_header_branch
      %34 = sbr.rel (%p32) target = $region8
    $region5: #{tpu_custom_call.1} parent=1 // loop_body
      %s36 = ssub.s32 %s31, 1
      %s37 = ssub.s32 %s31, 2
      %s38 = sadd.s32 %s31, 1
      %s39 = ssub.s32 %s31, %s38
      %p40 = scmp.eq.s32.totalorder %s39, 0
      %s42 = sadd.s32 %s41, 1
      %s43 = scalar_select %p40, %s41, %s42
      %p46 = pneg %p40
      %p47 = scmp.eq.s32.totalorder %s31, 1
      %p48 = por %p46, %p47
      %p49 = scmp.ne.s32.totalorder %s41, %s44
      %p50 = scmp.eq.s32.totalorder %s31, 0
      %p51 = por %p49, %p50
      %p52 = scmp.ne.s32.totalorder %s41, %s44
      %p53 = scmp.eq.s32.totalorder %s36, 1
      %p54 = por %p52, %p53
      %p55 = scmp.ne.s32.totalorder %s44, %s45
      %p56 = scmp.eq.s32.totalorder %s36, 0
      %p57 = por %p55, %p56
      %p58 = scmp.ne.s32.totalorder %s44, %s45
      %p59 = scmp.eq.s32.totalorder %s37, 1
      %p60 = por %p58, %p59
      %p62 = scmp.ne.s32.totalorder %s45, %s61
      %p63 = scmp.eq.s32.totalorder %s37, 0
      %p64 = por %p62, %p63
      %s66 = sadd.s32 %s65, 1
      %p69 = scmp.eq.s32.totalorder %s31, 1
      %p70 = scmp.ne.s32.totalorder %s65, %s67
      %p71 = scmp.eq.s32.totalorder %s31, 0
      %p72 = por %p70, %p71
      %p73 = scmp.ne.s32.totalorder %s65, %s67
      %p74 = scmp.eq.s32.totalorder %s36, 1
      %p75 = por %p73, %p74
      %p76 = scmp.ne.s32.totalorder %s67, %s68
      %p77 = scmp.eq.s32.totalorder %s36, 0
      %p78 = por %p76, %p77
      %p79 = scmp.ne.s32.totalorder %s67, %s68
      %p80 = scmp.eq.s32.totalorder %s37, 1
      %p81 = por %p79, %p80
      %p83 = scmp.ne.s32.totalorder %s68, %s82
      %p84 = scmp.eq.s32.totalorder %s37, 0
      %p85 = por %p83, %p84
      %s87 = sadd.s32 %s86, 1
      %p90 = scmp.eq.s32.totalorder %s31, 1
      %p91 = scmp.ne.s32.totalorder %s86, %s88
      %p92 = scmp.eq.s32.totalorder %s31, 0
      %p93 = por %p91, %p92
      %p94 = scmp.ne.s32.totalorder %s86, %s88
      %p95 = scmp.eq.s32.totalorder %s36, 1
      %p96 = por %p94, %p95
      %p97 = scmp.ne.s32.totalorder %s88, %s89
      %p98 = scmp.eq.s32.totalorder %s36, 0
      %p99 = por %p97, %p98
      %p100 = scmp.ne.s32.totalorder %s88, %s89
      %p101 = scmp.eq.s32.totalorder %s37, 1
      %p102 = por %p100, %p101
      %p104 = scmp.ne.s32.totalorder %s89, %s103
      %p105 = scmp.eq.s32.totalorder %s37, 0
      %p106 = por %p104, %p105
      %s108 = sadd.s32 %s107, 1
      %p111 = scmp.eq.s32.totalorder %s31, 1
      %p112 = scmp.ne.s32.totalorder %s107, %s109
      %p113 = scmp.eq.s32.totalorder %s31, 0
      %p114 = por %p112, %p113
      %p115 = scmp.ne.s32.totalorder %s107, %s109
      %p116 = scmp.eq.s32.totalorder %s36, 1
      %p117 = por %p115, %p116
      %p118 = scmp.ne.s32.totalorder %s109, %s110
      %p119 = scmp.eq.s32.totalorder %s36, 0
      %p120 = por %p118, %p119
      %p121 = scmp.ne.s32.totalorder %s109, %s110
      %p122 = scmp.eq.s32.totalorder %s37, 1
      %p123 = por %p121, %p122
      %p125 = scmp.ne.s32.totalorder %s110, %s124
      %p126 = scmp.eq.s32.totalorder %s37, 0
      %p127 = por %p125, %p126
      %s129 = sadd.s32 %s128, 1
      %p132 = scmp.eq.s32.totalorder %s31, 1
      %p133 = scmp.ne.s32.totalorder %s128, %s130
      %p134 = scmp.eq.s32.totalorder %s31, 0
      %p135 = por %p133, %p134
      %p136 = scmp.ne.s32.totalorder %s128, %s130
      %p137 = scmp.eq.s32.totalorder %s36, 1
      %p138 = por %p136, %p137
      %p139 = scmp.ne.s32.totalorder %s130, %s131
      %p140 = scmp.eq.s32.totalorder %s36, 0
      %p141 = por %p139, %p140
      %p142 = scmp.ne.s32.totalorder %s130, %s131
      %p143 = scmp.eq.s32.totalorder %s37, 1
      %p144 = por %p142, %p143
      %p146 = scmp.ne.s32.totalorder %s131, %s145
      %p147 = scmp.eq.s32.totalorder %s37, 0
      %p148 = por %p146, %p147
      %s150 = sadd.s32 %s149, 1
      %p153 = scmp.eq.s32.totalorder %s31, 1
      %p154 = scmp.ne.s32.totalorder %s149, %s151
      %p155 = scmp.eq.s32.totalorder %s31, 0
      %p156 = por %p154, %p155
      %p157 = scmp.ne.s32.totalorder %s149, %s151
      %p158 = scmp.eq.s32.totalorder %s36, 1
      %p159 = por %p157, %p158
      %p160 = scmp.ne.s32.totalorder %s151, %s152
      %p161 = scmp.eq.s32.totalorder %s36, 0
      %p162 = por %p160, %p161
      %p163 = scmp.ne.s32.totalorder %s151, %s152
      %p164 = scmp.eq.s32.totalorder %s37, 1
      %p165 = por %p163, %p164
      %p167 = scmp.ne.s32.totalorder %s152, %s166
      %p168 = scmp.eq.s32.totalorder %s37, 0
      %p169 = por %p167, %p168
      %s171 = sadd.s32 %s170, 1
      %p174 = scmp.eq.s32.totalorder %s31, 1
      %p175 = scmp.ne.s32.totalorder %s170, %s172
      %p176 = scmp.eq.s32.totalorder %s31, 0
      %p177 = por %p175, %p176
      %p178 = scmp.ne.s32.totalorder %s170, %s172
      %p179 = scmp.eq.s32.totalorder %s36, 1
      %p180 = por %p178, %p179
      %p181 = scmp.ne.s32.totalorder %s172, %s173
      %p182 = scmp.eq.s32.totalorder %s36, 0
      %p183 = por %p181, %p182
      %p184 = scmp.ne.s32.totalorder %s172, %s173
      %p185 = scmp.eq.s32.totalorder %s37, 1
      %p186 = por %p184, %p185
      %p188 = scmp.ne.s32.totalorder %s173, %s187
      %p189 = scmp.eq.s32.totalorder %s37, 0
      %p190 = por %p188, %p189
      %s192 = sadd.s32 %s191, 1
      %p195 = scmp.eq.s32.totalorder %s31, 1
      %p196 = scmp.ne.s32.totalorder %s191, %s193
      %p197 = scmp.eq.s32.totalorder %s31, 0
      %p198 = por %p196, %p197
      %p199 = scmp.ne.s32.totalorder %s191, %s193
      %p200 = scmp.eq.s32.totalorder %s36, 1
      %p201 = por %p199, %p200
      %p202 = scmp.ne.s32.totalorder %s193, %s194
      %p203 = scmp.eq.s32.totalorder %s36, 0
      %p204 = por %p202, %p203
      %p205 = scmp.ne.s32.totalorder %s193, %s194
      %p206 = scmp.eq.s32.totalorder %s37, 1
      %p207 = por %p205, %p206
      %p209 = scmp.ne.s32.totalorder %s194, %s208
      %p210 = scmp.eq.s32.totalorder %s37, 0
      %p211 = por %p209, %p210
      %s213 = sadd.s32 %s212, 1
      %p216 = scmp.eq.s32.totalorder %s31, 1
      %p217 = scmp.ne.s32.totalorder %s212, %s214
      %p218 = scmp.eq.s32.totalorder %s31, 0
      %p219 = por %p217, %p218
      %p220 = scmp.ne.s32.totalorder %s212, %s214
      %p221 = scmp.eq.s32.totalorder %s36, 1
      %p222 = por %p220, %p221
      %p223 = scmp.ne.s32.totalorder %s214, %s215
      %p224 = scmp.eq.s32.totalorder %s36, 0
      %p225 = por %p223, %p224
      %p226 = scmp.ne.s32.totalorder %s214, %s215
      %p227 = scmp.eq.s32.totalorder %s37, 1
      %p228 = por %p226, %p227
      %p230 = scmp.ne.s32.totalorder %s215, %s229
      %p231 = scmp.eq.s32.totalorder %s37, 0
      %p232 = por %p230, %p231
      %s234 = sadd.s32 %s233, 1
      %p237 = scmp.eq.s32.totalorder %s31, 1
      %p238 = scmp.ne.s32.totalorder %s233, %s235
      %p239 = scmp.eq.s32.totalorder %s31, 0
      %p240 = por %p238, %p239
      %p241 = scmp.ne.s32.totalorder %s233, %s235
      %p242 = scmp.eq.s32.totalorder %s36, 1
      %p243 = por %p241, %p242
      %p244 = scmp.ne.s32.totalorder %s235, %s236
      %p245 = scmp.eq.s32.totalorder %s36, 0
      %p246 = por %p244, %p245
      %p247 = scmp.ne.s32.totalorder %s235, %s236
      %p248 = scmp.eq.s32.totalorder %s37, 1
      %p249 = por %p247, %p248
      %p251 = scmp.ne.s32.totalorder %s236, %s250
      %p252 = scmp.eq.s32.totalorder %s37, 0
      %p253 = por %p251, %p252
      %s255 = sadd.s32 %s254, 1
      %p258 = scmp.eq.s32.totalorder %s31, 1
      %p259 = scmp.ne.s32.totalorder %s254, %s256
      %p260 = scmp.eq.s32.totalorder %s31, 0
      %p261 = por %p259, %p260
      %p262 = scmp.ne.s32.totalorder %s254, %s256
      %p263 = scmp.eq.s32.totalorder %s36, 1
      %p264 = por %p262, %p263
      %p265 = scmp.ne.s32.totalorder %s256, %s257
      %p266 = scmp.eq.s32.totalorder %s36, 0
      %p267 = por %p265, %p266
      %p268 = scmp.ne.s32.totalorder %s256, %s257
      %p269 = scmp.eq.s32.totalorder %s37, 1
      %p270 = por %p268, %p269
      %p272 = scmp.ne.s32.totalorder %s257, %s271
      %p273 = scmp.eq.s32.totalorder %s37, 0
      %p274 = por %p272, %p273
      %s276 = sadd.s32 %s275, 1
      %p279 = scmp.eq.s32.totalorder %s31, 1
      %p280 = scmp.ne.s32.totalorder %s275, %s277
      %p281 = scmp.eq.s32.totalorder %s31, 0
      %p282 = por %p280, %p281
      %p283 = scmp.ne.s32.totalorder %s275, %s277
      %p284 = scmp.eq.s32.totalorder %s36, 1
      %p285 = por %p283, %p284
      %p286 = scmp.ne.s32.totalorder %s277, %s278
      %p287 = scmp.eq.s32.totalorder %s36, 0
      %p288 = por %p286, %p287
      %p289 = scmp.ne.s32.totalorder %s277, %s278
      %p290 = scmp.eq.s32.totalorder %s37, 1
      %p291 = por %p289, %p290
      %p293 = scmp.ne.s32.totalorder %s278, %s292
      %p294 = scmp.eq.s32.totalorder %s37, 0
      %p295 = por %p293, %p294
      %s297 = sadd.s32 %s296, 1
      %p300 = scmp.eq.s32.totalorder %s31, 1
      %p301 = scmp.ne.s32.totalorder %s296, %s298
      %p302 = scmp.eq.s32.totalorder %s31, 0
      %p303 = por %p301, %p302
      %p304 = scmp.ne.s32.totalorder %s296, %s298
      %p305 = scmp.eq.s32.totalorder %s36, 1
      %p306 = por %p304, %p305
      %p307 = scmp.ne.s32.totalorder %s298, %s299
      %p308 = scmp.eq.s32.totalorder %s36, 0
      %p309 = por %p307, %p308
      %p310 = scmp.ne.s32.totalorder %s298, %s299
      %p311 = scmp.eq.s32.totalorder %s37, 1
      %p312 = por %p310, %p311
      %p314 = scmp.ne.s32.totalorder %s299, %s313
      %p315 = scmp.eq.s32.totalorder %s37, 0
      %p316 = por %p314, %p315
      %s317 = ssub.s32 %s31, %s38
      %p318 = scmp.eq.s32.totalorder %s317, 0
      %s320 = sadd.s32 %s319, 1
      %s321 = scalar_select %p318, %s319, %s320
      %p324 = pneg %p318
      %p325 = scmp.eq.s32.totalorder %s31, 1
      %p326 = por %p324, %p325
      %p327 = scmp.ne.s32.totalorder %s319, %s322
      %p328 = scmp.eq.s32.totalorder %s31, 0
      %p329 = por %p327, %p328
      %p330 = scmp.ne.s32.totalorder %s319, %s322
      %p331 = scmp.eq.s32.totalorder %s36, 1
      %p332 = por %p330, %p331
      %p333 = scmp.ne.s32.totalorder %s322, %s323
      %p334 = scmp.eq.s32.totalorder %s36, 0
      %p335 = por %p333, %p334
      %p336 = scmp.ne.s32.totalorder %s322, %s323
      %p337 = scmp.eq.s32.totalorder %s37, 1
      %p338 = por %p336, %p337
      %p340 = scmp.ne.s32.totalorder %s323, %s339
      %p341 = scmp.eq.s32.totalorder %s37, 0
      %p342 = por %p340, %p341
      %p343 = scmp.le.s32.totalorder 1, %s31
      %p344 = scmp.lt.s32.totalorder %s31, 3
      %p345 = pnand %p343, %p344
      %p346 = pneg %p345
      // Predicated region
      $region9: #{tpu_custom_call.1} parent=5 // pred_check
        _
      $region10: #{tpu_custom_call.1} parent=5 // pred_check_branch
        %348 = sbr.rel (%p345) target = $region12
      $region11: #{tpu_custom_call.1} parent=5 // pred_region
        %s349 = ssub.s32 %s31, 1
        // Predicated region
        $region13: #{tpu_custom_call.1} parent=11 // pred_check
          %p350 = pneg %p78
        $region14: #{tpu_custom_call.1} parent=11 // pred_check_branch
          %352 = sbr.rel (%p350) target = $region16
        $region15: #{tpu_custom_call.1} parent=11 // pred_region
          %s354 = ssub.s32 512, 512
          %355 = vsyncadd [#allocation10], %s354
          %s356 = sshll.u32 [#allocation9], 4
          %s357 = int_to_ptr.vmem [resolvable:$true] %s356
          %362 = dma.hbm_to_vmem [thread:$0]  %s1, 512, %s357, [#allocation10], 128, 128, 8
        $region16: #{tpu_custom_call.1} parent=11 // pred_fallthru
          _
        // Predicated region
        $region17: #{tpu_custom_call.1} parent=11 // pred_check
          %p363 = pneg %p99
        $region18: #{tpu_custom_call.1} parent=11 // pred_check_branch
          %365 = sbr.rel (%p363) target = $region20
        $region19: #{tpu_custom_call.1} parent=11 // pred_region
          %s367 = ssub.s32 512, 512
          %368 = vsyncadd [#allocation10], %s367
          %s369 = sshll.u32 [#allocation11], 4
          %s370 = int_to_ptr.vmem [resolvable:$true] %s369
          %375 = dma.hbm_to_vmem [thread:$0]  %s2, 512, %s370, [#allocation10], 128, 128, 8
        $region20: #{tpu_custom_call.1} parent=11 // pred_fallthru
          _
        // Predicated region
        $region21: #{tpu_custom_call.1} parent=11 // pred_check
          %p376 = pneg %p120
        $region22: #{tpu_custom_call.1} parent=11 // pred_check_branch
          %378 = sbr.rel (%p376) target = $region24
        $region23: #{tpu_custom_call.1} parent=11 // pred_region
          %s380 = ssub.s32 512, 512
          %381 = vsyncadd [#allocation13], %s380
          %s382 = sshll.u32 [#allocation12], 4
          %s383 = int_to_ptr.vmem [resolvable:$true] %s382
          %388 = dma.hbm_to_vmem [thread:$0]  %s3, 512, %s383, [#allocation13], 128, 128, 8
        $region24: #{tpu_custom_call.1} parent=11 // pred_fallthru
          _
        // Predicated region
        $region25: #{tpu_custom_call.1} parent=11 // pred_check
          %p389 = pneg %p141
        $region26: #{tpu_custom_call.1} parent=11 // pred_check_branch
          %391 = sbr.rel (%p389) target = $region28
        $region27: #{tpu_custom_call.1} parent=11 // pred_region
          %s393 = ssub.s32 512, 512
          %394 = vsyncadd [#allocation13], %s393
          %s395 = sshll.u32 [#allocation14], 4
          %s396 = int_to_ptr.vmem [resolvable:$true] %s395
          %401 = dma.hbm_to_vmem [thread:$0]  %s4, 512, %s396, [#allocation13], 128, 128, 8
        $region28: #{tpu_custom_call.1} parent=11 // pred_fallthru
          _
        // Predicated region
        $region29: #{tpu_custom_call.1} parent=11 // pred_check
          %p402 = pneg %p162
        $region30: #{tpu_custom_call.1} parent=11 // pred_check_branch
          %404 = sbr.rel (%p402) target = $region32
        $region31: #{tpu_custom_call.1} parent=11 // pred_region
          %s406 = ssub.s32 512, 512
          %407 = vsyncadd [#allocation16], %s406
          %s408 = sshll.u32 [#allocation15], 4
          %s409 = int_to_ptr.vmem [resolvable:$true] %s408
          %414 = dma.hbm_to_vmem [thread:$0]  %s5, 512, %s409, [#allocation16], 128, 128, 8
        $region32: #{tpu_custom_call.1} parent=11 // pred_fallthru
          _
        // Predicated region
        $region33: #{tpu_custom_call.1} parent=11 // pred_check
          %p415 = pneg %p183
        $region34: #{tpu_custom_call.1} parent=11 // pred_check_branch
          %417 = sbr.rel (%p415) target = $region36
        $region35: #{tpu_custom_call.1} parent=11 // pred_region
          %s419 = ssub.s32 16, 16
          %420 = vsyncadd [#allocation16], %s419
          %s422 = sshll.u32 [#allocation17], 4
          %s423 = int_to_ptr.vmem [resolvable:$true] %s422
          %425 = dma.hbm_to_vmem [thread:$0]  %s6, 16, %s423, [#allocation16]
        $region36: #{tpu_custom_call.1} parent=11 // pred_fallthru
          _
        // Predicated region
        $region37: #{tpu_custom_call.1} parent=11 // pred_check
          %p426 = pneg %p204
        $region38: #{tpu_custom_call.1} parent=11 // pred_check_branch
          %428 = sbr.rel (%p426) target = $region40
        $region39: #{tpu_custom_call.1} parent=11 // pred_region
          %s430 = ssub.s32 1024, 1024
          %431 = vsyncadd [#allocation19], %s430
          %s432 = sshll.u32 [#allocation18], 4
          %s433 = int_to_ptr.vmem [resolvable:$true] %s432
          %438 = dma.hbm_to_vmem [thread:$0]  %s7, 1024, %s433, [#allocation19], 128, 128, 8
        $region40: #{tpu_custom_call.1} parent=11 // pred_fallthru
          _
        // Predicated region
        $region41: #{tpu_custom_call.1} parent=11 // pred_check
          %p439 = pneg %p225
        $region42: #{tpu_custom_call.1} parent=11 // pred_check_branch
          %441 = sbr.rel (%p439) target = $region44
        $region43: #{tpu_custom_call.1} parent=11 // pred_region
          %s443 = ssub.s32 16, 16
          %444 = vsyncadd [#allocation19], %s443
          %s446 = sshll.u32 [#allocation20], 4
          %s447 = int_to_ptr.vmem [resolvable:$true] %s446
          %449 = dma.hbm_to_vmem [thread:$0]  %s8, 16, %s447, [#allocation19]
        $region44: #{tpu_custom_call.1} parent=11 // pred_fallthru
          _
        // Predicated region
        $region45: #{tpu_custom_call.1} parent=11 // pred_check
          %p450 = pneg %p246
        $region46: #{tpu_custom_call.1} parent=11 // pred_check_branch
          %452 = sbr.rel (%p450) target = $region48
        $region47: #{tpu_custom_call.1} parent=11 // pred_region
          %s454 = ssub.s32 16, 16
          %455 = vsyncadd [#allocation22], %s454
          %s457 = sshll.u32 [#allocation21], 4
          %s458 = int_to_ptr.vmem [resolvable:$true] %s457
          %460 = dma.hbm_to_vmem [thread:$0]  %s9, 16, %s458, [#allocation22]
        $region48: #{tpu_custom_call.1} parent=11 // pred_fallthru
          _
        // Predicated region
        $region49: #{tpu_custom_call.1} parent=11 // pred_check
          %p461 = pneg %p267
        $region50: #{tpu_custom_call.1} parent=11 // pred_check_branch
          %463 = sbr.rel (%p461) target = $region52
        $region51: #{tpu_custom_call.1} parent=11 // pred_region
          %s465 = ssub.s32 16, 16
          %466 = vsyncadd [#allocation22], %s465
          %s468 = sshll.u32 [#allocation23], 4
          %s469 = int_to_ptr.vmem [resolvable:$true] %s468
          %471 = dma.hbm_to_vmem [thread:$0]  %s10, 16, %s469, [#allocation22]
        $region52: #{tpu_custom_call.1} parent=11 // pred_fallthru
          _
        // Predicated region
        $region53: #{tpu_custom_call.1} parent=11 // pred_check
          %p472 = pneg %p288
        $region54: #{tpu_custom_call.1} parent=11 // pred_check_branch
          %474 = sbr.rel (%p472) target = $region56
        $region55: #{tpu_custom_call.1} parent=11 // pred_region
          %s476 = ssub.s32 16, 16
          %477 = vsyncadd [#allocation25], %s476
          %s479 = sshll.u32 [#allocation24], 4
          %s480 = int_to_ptr.vmem [resolvable:$true] %s479
          %482 = dma.hbm_to_vmem [thread:$0]  %s11, 16, %s480, [#allocation25]
        $region56: #{tpu_custom_call.1} parent=11 // pred_fallthru
          _
        // Predicated region
        $region57: #{tpu_custom_call.1} parent=11 // pred_check
          %p483 = pneg %p309
        $region58: #{tpu_custom_call.1} parent=11 // pred_check_branch
          %485 = sbr.rel (%p483) target = $region60
        $region59: #{tpu_custom_call.1} parent=11 // pred_region
          %s487 = ssub.s32 16, 16
          %488 = vsyncadd [#allocation25], %s487
          %s490 = sshll.u32 [#allocation26], 4
          %s491 = int_to_ptr.vmem [resolvable:$true] %s490
          %493 = dma.hbm_to_vmem [thread:$0]  %s12, 16, %s491, [#allocation25]
        $region60: #{tpu_custom_call.1} parent=11 // pred_fallthru
          _
      $region12: #{tpu_custom_call.1} parent=5 // pred_fallthru
        _
      %p494 = scmp.lt.s32.totalorder %s31, 2
      // Predicated region
      $region61: #{tpu_custom_call.1} parent=5 // pred_check
        %p495 = pneg %p494
      $region62: #{tpu_custom_call.1} parent=5 // pred_check_branch
        %497 = sbr.rel (%p495) target = $region64
      $region63: #{tpu_custom_call.1} parent=5 // pred_region
        // Predicated region
        $region65: #{tpu_custom_call.1} parent=63 // pred_check
          %p498 = pneg %p51
        $region66: #{tpu_custom_call.1} parent=63 // pred_check_branch
          %500 = sbr.rel (%p498) target = $region68
        $region67: #{tpu_custom_call.1} parent=63 // pred_region
          %s501 = sand.u32 %s41, 1
          %s502 = scalar_lea.sflag [#allocation7], %s501
          %s503 = sand.u32 %s41, 1
          %s504 = smul.addr %s503, 8
          %s505 = scalar_lea.vmem [#allocation6], %s504
          %s507 = ssub.s32 128, 128
          %508 = vsyncadd %s502, %s507
          %s509 = smul.addr %s31, 128
          %s510 = scalar_lea.hbm %s0, %s509
          %s512 = sshll.u32 %s505, 4
          %s513 = int_to_ptr.vmem [resolvable:$true] %s512
          %515 = dma.hbm_to_vmem [thread:$0]  %s510, 128, %s513, %s502
        $region68: #{tpu_custom_call.1} parent=63 // pred_fallthru
          _
      $region64: #{tpu_custom_call.1} parent=5 // pred_fallthru
        _
      %p516 = scmp.le.s32.totalorder 1, %s31
      %p517 = scmp.lt.s32.totalorder %s31, 3
      %p518 = pnand %p516, %p517
      %p519 = pneg %p518
      // Predicated region
      $region69: #{tpu_custom_call.1} parent=5 // pred_check
        _
      $region70: #{tpu_custom_call.1} parent=5 // pred_check_branch
        %521 = sbr.rel (%p518) target = $region72
      $region71: #{tpu_custom_call.1} parent=5 // pred_region
        %s522 = ssub.s32 %s31, 1
        %s523 = sand.u32 %s44, 1
        %s524 = scalar_lea.sflag [#allocation7], %s523
        %s525 = sand.u32 %s44, 1
        %s526 = smul.addr %s525, 8
        %s527 = scalar_lea.vmem [#allocation6], %s526
        // Predicated region
        $region73: #{tpu_custom_call.1} parent=71 // pred_check
          %p528 = pneg %p57
        $region74: #{tpu_custom_call.1} parent=71 // pred_check_branch
          %530 = sbr.rel (%p528) target = $region76
        $region75: #{tpu_custom_call.1} parent=71 // pred_region
          %531 = dma.done %s524, 128
        $region76: #{tpu_custom_call.1} parent=71 // pred_fallthru
          _
        // Predicated region
        $region77: #{tpu_custom_call.1} parent=71 // pred_check
          %p532 = pneg %p78
        $region78: #{tpu_custom_call.1} parent=71 // pred_check_branch
          %534 = sbr.rel (%p532) target = $region80
        $region79: #{tpu_custom_call.1} parent=71 // pred_region
          %535 = dma.done [#allocation10], 512
        $region80: #{tpu_custom_call.1} parent=71 // pred_fallthru
          _
        // Predicated region
        $region81: #{tpu_custom_call.1} parent=71 // pred_check
          %p536 = pneg %p99
        $region82: #{tpu_custom_call.1} parent=71 // pred_check_branch
          %538 = sbr.rel (%p536) target = $region84
        $region83: #{tpu_custom_call.1} parent=71 // pred_region
          %539 = dma.done [#allocation10], 512
        $region84: #{tpu_custom_call.1} parent=71 // pred_fallthru
          _
        // Predicated region
        $region85: #{tpu_custom_call.1} parent=71 // pred_check
          %p540 = pneg %p120
        $region86: #{tpu_custom_call.1} parent=71 // pred_check_branch
          %542 = sbr.rel (%p540) target = $region88
        $region87: #{tpu_custom_call.1} parent=71 // pred_region
          %543 = dma.done [#allocation13], 512
        $region88: #{tpu_custom_call.1} parent=71 // pred_fallthru
          _
        // Predicated region
        $region89: #{tpu_custom_call.1} parent=71 // pred_check
          %p544 = pneg %p141
        $region90: #{tpu_custom_call.1} parent=71 // pred_check_branch
          %546 = sbr.rel (%p544) target = $region92
        $region91: #{tpu_custom_call.1} parent=71 // pred_region
          %547 = dma.done [#allocation13], 512
        $region92: #{tpu_custom_call.1} parent=71 // pred_fallthru
          _
        // Predicated region
        $region93: #{tpu_custom_call.1} parent=71 // pred_check
          %p548 = pneg %p162
        $region94: #{tpu_custom_call.1} parent=71 // pred_check_branch
          %550 = sbr.rel (%p548) target = $region96
        $region95: #{tpu_custom_call.1} parent=71 // pred_region
          %551 = dma.done [#allocation16], 512
        $region96: #{tpu_custom_call.1} parent=71 // pred_fallthru
          _
        // Predicated region
        $region97: #{tpu_custom_call.1} parent=71 // pred_check
          %p552 = pneg %p183
        $region98: #{tpu_custom_call.1} parent=71 // pred_check_branch
          %554 = sbr.rel (%p552) target = $region100
        $region99: #{tpu_custom_call.1} parent=71 // pred_region
          %555 = dma.done [#allocation16], 16
        $region100: #{tpu_custom_call.1} parent=71 // pred_fallthru
          _
        // Predicated region
        $region101: #{tpu_custom_call.1} parent=71 // pred_check
          %p556 = pneg %p204
        $region102: #{tpu_custom_call.1} parent=71 // pred_check_branch
          %558 = sbr.rel (%p556) target = $region104
        $region103: #{tpu_custom_call.1} parent=71 // pred_region
          %559 = dma.done [#allocation19], 1024
        $region104: #{tpu_custom_call.1} parent=71 // pred_fallthru
          _
        // Predicated region
        $region105: #{tpu_custom_call.1} parent=71 // pred_check
          %p560 = pneg %p225
        $region106: #{tpu_custom_call.1} parent=71 // pred_check_branch
          %562 = sbr.rel (%p560) target = $region108
        $region107: #{tpu_custom_call.1} parent=71 // pred_region
          %563 = dma.done [#allocation19], 16
        $region108: #{tpu_custom_call.1} parent=71 // pred_fallthru
          _
        // Predicated region
        $region109: #{tpu_custom_call.1} parent=71 // pred_check
          %p564 = pneg %p246
        $region110: #{tpu_custom_call.1} parent=71 // pred_check_branch
          %566 = sbr.rel (%p564) target = $region112
        $region111: #{tpu_custom_call.1} parent=71 // pred_region
          %567 = dma.done [#allocation22], 16
        $region112: #{tpu_custom_call.1} parent=71 // pred_fallthru
          _
        // Predicated region
        $region113: #{tpu_custom_call.1} parent=71 // pred_check
          %p568 = pneg %p267
        $region114: #{tpu_custom_call.1} parent=71 // pred_check_branch
          %570 = sbr.rel (%p568) target = $region116
        $region115: #{tpu_custom_call.1} parent=71 // pred_region
          %571 = dma.done [#allocation22], 16
        $region116: #{tpu_custom_call.1} parent=71 // pred_fallthru
          _
        // Predicated region
        $region117: #{tpu_custom_call.1} parent=71 // pred_check
          %p572 = pneg %p288
        $region118: #{tpu_custom_call.1} parent=71 // pred_check_branch
          %574 = sbr.rel (%p572) target = $region120
        $region119: #{tpu_custom_call.1} parent=71 // pred_region
          %575 = dma.done [#allocation25], 16
        $region120: #{tpu_custom_call.1} parent=71 // pred_fallthru
          _
        // Predicated region
        $region121: #{tpu_custom_call.1} parent=71 // pred_check
          %p576 = pneg %p309
        $region122: #{tpu_custom_call.1} parent=71 // pred_check_branch
          %578 = sbr.rel (%p576) target = $region124
        $region123: #{tpu_custom_call.1} parent=71 // pred_region
          %579 = dma.done [#allocation25], 16
        $region124: #{tpu_custom_call.1} parent=71 // pred_fallthru
          _
        %s580 = sand.u32 %s44, 1
        %s581 = scalar_lea.sflag [#allocation7], %s580
        %s582 = sand.u32 %s44, 1
        %s583 = smul.addr %s582, 8
        %s584 = scalar_lea.vmem [#allocation6], %s583
        %p585 = pneg %p57
        %p586 = pneg %p54
        %p587 = pneg %p78
        %p588 = pneg %p75
        %p589 = pneg %p99
        %p590 = pneg %p96
        %p591 = pneg %p120
        %p592 = pneg %p117
        %p593 = pneg %p141
        %p594 = pneg %p138
        %p595 = pneg %p162
        %p596 = pneg %p159
        %p597 = pneg %p183
        %p598 = pneg %p180
        %p599 = pneg %p204
        %p600 = pneg %p201
        %p601 = pneg %p225
        %p602 = pneg %p222
        %p603 = pneg %p246
        %p604 = pneg %p243
        %p605 = pneg %p267
        %p606 = pneg %p264
        %p607 = pneg %p288
        %p608 = pneg %p285
        %p609 = pneg %p309
        %p610 = pneg %p306
        %p611 = pneg %p335
        %p612 = pneg %p332
        %s613 = sand.u32 %s322, 1
        %s614 = scalar_lea.sflag [#allocation8], %s613
        %s615 = sand.u32 %s322, 1
        %s616 = smul.addr %s615, 8
        %s617 = scalar_lea.vmem [#allocation27], %s616
        %v618 = vld [vmem:[%s527] sm:$0xff]
        %v619 = vld [vmem:[#allocation9] sm:$0xff]
        %v620 = vld [vmem:[#allocation9 + $0x8] sm:$0xff]
        %v621 = vld [vmem:[#allocation9 + $0x10] sm:$0xff]
        %v622 = vld [vmem:[#allocation9 + $0x18] sm:$0xff]
        %vm623 = vcmask 261120
        %v625 = vsel %vm623, %v618, 0
        %627 = vmatprep.subr.mxu0 0.0
        %628 = vmatpush1.msra.mxu0 %v619
        %629 = vmatprep.subr.mxu0 0.0
        %630 = vmatpush1.msra.mxu0 %v620
        %631 = vmatprep.subr.mxu0 0.0
        %632 = vmatpush1.msra.mxu0 %v621
        %633 = vmatprep.subr.mxu0 0.0
        %634 = vmatpush1.msra.mxu0 %v622
        %635 = vmatprep.subr.mxu0 0.0
        %636 = vmatpush1.msra.mxu0 0.0
        %637 = vmatprep.subr.mxu0 0.0
        %638 = vmatpush1.msra.mxu0 0.0
        %639 = vmatprep.subr.mxu0 0.0
        %640 = vmatpush1.msra.mxu0 0.0
        %641 = vmatprep.subr.mxu0 0.0
        %642 = vmatpush1.msra.mxu0 0.0
        %643 = vmatprep.subr.mxu0 0.0
        %644 = vmatpush1.msra.mxu0 0.0
        %645 = vmatprep.subr.mxu0 0.0
        %646 = vmatpush1.msra.mxu0 0.0
        %647 = vmatprep.subr.mxu0 0.0
        %648 = vmatpush1.msra.mxu0 0.0
        %649 = vmatprep.subr.mxu0 0.0
        %650 = vmatpush1.msra.mxu0 0.0
        %651 = vmatprep.subr.mxu0 0.0
        %652 = vmatpush1.msra.mxu0 0.0
        %653 = vmatprep.subr.mxu0 0.0
        %654 = vmatpush1.msra.mxu0 0.0
        %655 = vmatprep.subr.mxu0 0.0
        %656 = vmatpush1.msra.mxu0 0.0
        %657 = vmatprep.subr.mxu0 0.0
        %658 = vmatpush1.msra.mxu0 0.0
        %659 = vmatprep.subr.mxu0 0.0
        %660 = vmatpush1.msra.mxu0 0.0
        %661 = vmatprep.subr.mxu0 0.0
        %662 = vmatpush1.msra.mxu0 0.0
        %663 = vmatprep.subr.mxu0 0.0
        %664 = vmatpush1.msra.mxu0 0.0
        %665 = vmatprep.subr.mxu0 0.0
        %666 = vmatpush1.msra.mxu0 0.0
        %667 = vmatprep.subr.mxu0 0.0
        %668 = vmatpush1.msra.mxu0 0.0
        %669 = vmatprep.subr.mxu0 0.0
        %670 = vmatpush1.msra.mxu0 0.0
        %671 = vmatprep.subr.mxu0 0.0
        %672 = vmatpush1.msra.mxu0 0.0
        %673 = vmatprep.subr.mxu0 0.0
        %674 = vmatpush1.msra.mxu0 0.0
        %675 = vmatprep.subr.mxu0 0.0
        %676 = vmatpush1.msra.mxu0 0.0
        %677 = vmatprep.subr.mxu0 0.0
        %678 = vmatpush1.msra.mxu0 0.0
        %679 = vmatprep.subr.mxu0 0.0
        %680 = vmatpush1.msra.mxu0 0.0
        %681 = vmatprep.subr.mxu0 0.0
        %682 = vmatpush1.msra.mxu0 0.0
        %683 = vmatprep.subr.mxu0 0.0
        %684 = vmatpush1.msra.mxu0 0.0
        %685 = vmatprep.subr.mxu0 0.0
        %686 = vmatpush1.msra.mxu0 0.0
        %687 = vmatprep.subr.mxu0 0.0
        %688 = vmatpush1.msra.mxu0 0.0
        %689 = vmatprep.subr.mxu0 0.0
        %690 = vmatpush1.msra.mxu0 0.0
        %691 = vmatprep.mubr.f32.mxu0 0.0
        %692 = vmatmul.mubr.f32.gmra.mrb[0].mxu0 %v625
        %v693 = vpop.f32.mrb[0].mxu0
        %v694 = vadd.f32 0.0, %v693
        %v695 = vpop.f32.mrb[0].mxu0
        %696 = vdwg.mxu0
        %697 = vst.msk [vmem:[#allocation2] sm:$0xff] %vm623, %v694
        %v698 = vld [vmem:[#allocation11] sm:$0xff]
        %v699 = vld [vmem:[#allocation11 + $0x8] sm:$0xff]
        %v700 = vld [vmem:[#allocation11 + $0x10] sm:$0xff]
        %v701 = vld [vmem:[#allocation11 + $0x18] sm:$0xff]
        %702 = vmatprep.subr.mxu0 0.0
        %703 = vmatpush1.msra.mxu0 %v698
        %704 = vmatprep.subr.mxu0 0.0
        %705 = vmatpush1.msra.mxu0 %v699
        %706 = vmatprep.subr.mxu0 0.0
        %707 = vmatpush1.msra.mxu0 %v700
        %708 = vmatprep.subr.mxu0 0.0
        %709 = vmatpush1.msra.mxu0 %v701
        %710 = vmatprep.subr.mxu0 0.0
        %711 = vmatpush1.msra.mxu0 0.0
        %712 = vmatprep.subr.mxu0 0.0
        %713 = vmatpush1.msra.mxu0 0.0
        %714 = vmatprep.subr.mxu0 0.0
        %715 = vmatpush1.msra.mxu0 0.0
        %716 = vmatprep.subr.mxu0 0.0
        %717 = vmatpush1.msra.mxu0 0.0
        %718 = vmatprep.subr.mxu0 0.0
        %719 = vmatpush1.msra.mxu0 0.0
        %720 = vmatprep.subr.mxu0 0.0
        %721 = vmatpush1.msra.mxu0 0.0
        %722 = vmatprep.subr.mxu0 0.0
        %723 = vmatpush1.msra.mxu0 0.0
        %724 = vmatprep.subr.mxu0 0.0
        %725 = vmatpush1.msra.mxu0 0.0
        %726 = vmatprep.subr.mxu0 0.0
        %727 = vmatpush1.msra.mxu0 0.0
        %728 = vmatprep.subr.mxu0 0.0
        %729 = vmatpush1.msra.mxu0 0.0
        %730 = vmatprep.subr.mxu0 0.0
        %731 = vmatpush1.msra.mxu0 0.0
        %732 = vmatprep.subr.mxu0 0.0
        %733 = vmatpush1.msra.mxu0 0.0
        %734 = vmatprep.subr.mxu0 0.0
        %735 = vmatpush1.msra.mxu0 0.0
        %736 = vmatprep.subr.mxu0 0.0
        %737 = vmatpush1.msra.mxu0 0.0
        %738 = vmatprep.subr.mxu0 0.0
        %739 = vmatpush1.msra.mxu0 0.0
        %740 = vmatprep.subr.mxu0 0.0
        %741 = vmatpush1.msra.mxu0 0.0
        %742 = vmatprep.subr.mxu0 0.0
        %743 = vmatpush1.msra.mxu0 0.0
        %744 = vmatprep.subr.mxu0 0.0
        %745 = vmatpush1.msra.mxu0 0.0
        %746 = vmatprep.subr.mxu0 0.0
        %747 = vmatpush1.msra.mxu0 0.0
        %748 = vmatprep.subr.mxu0 0.0
        %749 = vmatpush1.msra.mxu0 0.0
        %750 = vmatprep.subr.mxu0 0.0
        %751 = vmatpush1.msra.mxu0 0.0
        %752 = vmatprep.subr.mxu0 0.0
        %753 = vmatpush1.msra.mxu0 0.0
        %754 = vmatprep.subr.mxu0 0.0
        %755 = vmatpush1.msra.mxu0 0.0
        %756 = vmatprep.subr.mxu0 0.0
        %757 = vmatpush1.msra.mxu0 0.0
        %758 = vmatprep.subr.mxu0 0.0
        %759 = vmatpush1.msra.mxu0 0.0
        %760 = vmatprep.subr.mxu0 0.0
        %761 = vmatpush1.msra.mxu0 0.0
        %762 = vmatprep.subr.mxu0 0.0
        %763 = vmatpush1.msra.mxu0 0.0
        %764 = vmatprep.subr.mxu0 0.0
        %765 = vmatpush1.msra.mxu0 0.0
        %766 = vmatprep.mubr.f32.mxu0 0.0
        %767 = vmatmul.mubr.f32.gmra.mrb[0].mxu0 %v625
        %v768 = vpop.f32.mrb[0].mxu0
        %v769 = vadd.f32 0.0, %v768
        %v770 = vpop.f32.mrb[0].mxu0
        %771 = vdwg.mxu0
        %772 = vst.msk [vmem:[#allocation3] sm:$0xff] %vm623, %v769
        %v773 = vld [vmem:[#allocation12] sm:$0xff]
        %v774 = vld [vmem:[#allocation12 + $0x8] sm:$0xff]
        %v775 = vld [vmem:[#allocation12 + $0x10] sm:$0xff]
        %v776 = vld [vmem:[#allocation12 + $0x18] sm:$0xff]
        %777 = vmatprep.subr.mxu0 0.0
        %778 = vmatpush1.msra.mxu0 %v773
        %779 = vmatprep.subr.mxu0 0.0
        %780 = vmatpush1.msra.mxu0 %v774
        %781 = vmatprep.subr.mxu0 0.0
        %782 = vmatpush1.msra.mxu0 %v775
        %783 = vmatprep.subr.mxu0 0.0
        %784 = vmatpush1.msra.mxu0 %v776
        %785 = vmatprep.subr.mxu0 0.0
        %786 = vmatpush1.msra.mxu0 0.0
        %787 = vmatprep.subr.mxu0 0.0
        %788 = vmatpush1.msra.mxu0 0.0
        %789 = vmatprep.subr.mxu0 0.0
        %790 = vmatpush1.msra.mxu0 0.0
        %791 = vmatprep.subr.mxu0 0.0
        %792 = vmatpush1.msra.mxu0 0.0
        %793 = vmatprep.subr.mxu0 0.0
        %794 = vmatpush1.msra.mxu0 0.0
        %795 = vmatprep.subr.mxu0 0.0
        %796 = vmatpush1.msra.mxu0 0.0
        %797 = vmatprep.subr.mxu0 0.0
        %798 = vmatpush1.msra.mxu0 0.0
        %799 = vmatprep.subr.mxu0 0.0
        %800 = vmatpush1.msra.mxu0 0.0
        %801 = vmatprep.subr.mxu0 0.0
        %802 = vmatpush1.msra.mxu0 0.0
        %803 = vmatprep.subr.mxu0 0.0
        %804 = vmatpush1.msra.mxu0 0.0
        %805 = vmatprep.subr.mxu0 0.0
        %806 = vmatpush1.msra.mxu0 0.0
        %807 = vmatprep.subr.mxu0 0.0
        %808 = vmatpush1.msra.mxu0 0.0
        %809 = vmatprep.subr.mxu0 0.0
        %810 = vmatpush1.msra.mxu0 0.0
        %811 = vmatprep.subr.mxu0 0.0
        %812 = vmatpush1.msra.mxu0 0.0
        %813 = vmatprep.subr.mxu0 0.0
        %814 = vmatpush1.msra.mxu0 0.0
        %815 = vmatprep.subr.mxu0 0.0
        %816 = vmatpush1.msra.mxu0 0.0
        %817 = vmatprep.subr.mxu0 0.0
        %818 = vmatpush1.msra.mxu0 0.0
        %819 = vmatprep.subr.mxu0 0.0
        %820 = vmatpush1.msra.mxu0 0.0
        %821 = vmatprep.subr.mxu0 0.0
        %822 = vmatpush1.msra.mxu0 0.0
        %823 = vmatprep.subr.mxu0 0.0
        %824 = vmatpush1.msra.mxu0 0.0
        %825 = vmatprep.subr.mxu0 0.0
        %826 = vmatpush1.msra.mxu0 0.0
        %827 = vmatprep.subr.mxu0 0.0
        %828 = vmatpush1.msra.mxu0 0.0
        %829 = vmatprep.subr.mxu0 0.0
        %830 = vmatpush1.msra.mxu0 0.0
        %831 = vmatprep.subr.mxu0 0.0
        %832 = vmatpush1.msra.mxu0 0.0
        %833 = vmatprep.subr.mxu0 0.0
        %834 = vmatpush1.msra.mxu0 0.0
        %835 = vmatprep.subr.mxu0 0.0
        %836 = vmatpush1.msra.mxu0 0.0
        %837 = vmatprep.subr.mxu0 0.0
        %838 = vmatpush1.msra.mxu0 0.0
        %839 = vmatprep.subr.mxu0 0.0
        %840 = vmatpush1.msra.mxu0 0.0
        %841 = vmatprep.mubr.f32.mxu0 0.0
        %842 = vmatmul.mubr.f32.gmra.mrb[0].mxu0 %v625
        %v843 = vpop.f32.mrb[0].mxu0
        %v844 = vadd.f32 0.0, %v843
        %v845 = vpop.f32.mrb[0].mxu0
        %846 = vdwg.mxu0
        %847 = vst.msk [vmem:[#allocation4] sm:$0xff] %vm623, %v844
        %v848 = vld [vmem:[#allocation2] sm:$0xff]
        %v849 = vld [vmem:[#allocation3] sm:$0xff]
        %v850 = vld [vmem:[#allocation4] sm:$0xff]
        %vm851 = vcmask 64512
        %v853 = vsel %vm851, %v848, 0
        %v856 = vsel %vm851, %v849, 0
        %858 = vmatprep.subr.mxu0 0.0
        %859 = vmatpush1.xpose.msra.mxu0 %v856
        %860 = vmatprep.subr.mxu0 0.0
        %861 = vmatpush1.xpose.msra.mxu0 0.0
        %862 = vmatprep.subr.mxu0 0.0
        %863 = vmatpush1.xpose.msra.mxu0 0.0
        %864 = vmatprep.subr.mxu0 0.0
        %865 = vmatpush1.xpose.msra.mxu0 0.0
        %866 = vmatprep.subr.mxu0 0.0
        %867 = vmatpush1.xpose.msra.mxu0 0.0
        %868 = vmatprep.subr.mxu0 0.0
        %869 = vmatpush1.xpose.msra.mxu0 0.0
        %870 = vmatprep.subr.mxu0 0.0
        %871 = vmatpush1.xpose.msra.mxu0 0.0
        %872 = vmatprep.subr.mxu0 0.0
        %873 = vmatpush1.xpose.msra.mxu0 0.0
        %874 = vmatprep.subr.mxu0 0.0
        %875 = vmatpush1.xpose.msra.mxu0 0.0
        %876 = vmatprep.subr.mxu0 0.0
        %877 = vmatpush1.xpose.msra.mxu0 0.0
        %878 = vmatprep.subr.mxu0 0.0
        %879 = vmatpush1.xpose.msra.mxu0 0.0
        %880 = vmatprep.subr.mxu0 0.0
        %881 = vmatpush1.xpose.msra.mxu0 0.0
        %882 = vmatprep.subr.mxu0 0.0
        %883 = vmatpush1.xpose.msra.mxu0 0.0
        %884 = vmatprep.subr.mxu0 0.0
        %885 = vmatpush1.xpose.msra.mxu0 0.0
        %886 = vmatprep.subr.mxu0 0.0
        %887 = vmatpush1.xpose.msra.mxu0 0.0
        %888 = vmatprep.subr.mxu0 0.0
        %889 = vmatpush1.xpose.msra.mxu0 0.0
        %890 = vmatprep.subr.mxu0 0.0
        %891 = vmatpush1.xpose.msra.mxu0 0.0
        %892 = vmatprep.subr.mxu0 0.0
        %893 = vmatpush1.xpose.msra.mxu0 0.0
        %894 = vmatprep.subr.mxu0 0.0
        %895 = vmatpush1.xpose.msra.mxu0 0.0
        %896 = vmatprep.subr.mxu0 0.0
        %897 = vmatpush1.xpose.msra.mxu0 0.0
        %898 = vmatprep.subr.mxu0 0.0
        %899 = vmatpush1.xpose.msra.mxu0 0.0
        %900 = vmatprep.subr.mxu0 0.0
        %901 = vmatpush1.xpose.msra.mxu0 0.0
        %902 = vmatprep.subr.mxu0 0.0
        %903 = vmatpush1.xpose.msra.mxu0 0.0
        %904 = vmatprep.subr.mxu0 0.0
        %905 = vmatpush1.xpose.msra.mxu0 0.0
        %906 = vmatprep.subr.mxu0 0.0
        %907 = vmatpush1.xpose.msra.mxu0 0.0
        %908 = vmatprep.subr.mxu0 0.0
        %909 = vmatpush1.xpose.msra.mxu0 0.0
        %910 = vmatprep.subr.mxu0 0.0
        %911 = vmatpush1.xpose.msra.mxu0 0.0
        %912 = vmatprep.subr.mxu0 0.0
        %913 = vmatpush1.xpose.msra.mxu0 0.0
        %914 = vmatprep.subr.mxu0 0.0
        %915 = vmatpush1.xpose.msra.mxu0 0.0
        %916 = vmatprep.subr.mxu0 0.0
        %917 = vmatpush1.xpose.msra.mxu0 0.0
        %918 = vmatprep.subr.mxu0 0.0
        %919 = vmatpush1.xpose.msra.mxu0 0.0
        %920 = vmatprep.subr.mxu0 0.0
        %921 = vmatpush1.xpose.msra.mxu0 0.0
        %922 = vmatprep.mubr.f32.mxu0 0.0
        %923 = vmatmul.mubr.f32.gmra.mrb[0].mxu0 %v853
        %v924 = vpop.f32.mrb[0].mxu0
        %v925 = vadd.f32 0.0, %v924
        %v926 = vpop.f32.mrb[0].mxu0
        %927 = vdwg.mxu0
        %v928 = vsel %vm851, %v925, -inf
        %929 = vmax.xlane.f32.xlu0 %v928
        %v930 = vpop.xlane.xlu0 %929
        %v931 = vsub.f32 %v925, %v930
        %v932 = vmul.f32 %v931, 1.442695
        %v933 = vpow.pop %v932
        %v934 = vsel %vm851, %v933, 0.0
        %935 = vadd.xlane.f32.xlu0 %v934
        %v936 = vpop.xlane.xlu0 %935
        %v937 = vrcp.pop %v936
        %v938 = vmul.f32 %v933, %v937
        %v940 = vsel %vm851, %v938, 0
        %942 = vmatprep.subr.mxu0 0.0
        %943 = vmatpush1.msra.mxu0 %v850
        %944 = vmatprep.subr.mxu0 0.0
        %945 = vmatpush1.msra.mxu0 0.0
        %946 = vmatprep.subr.mxu0 0.0
        %947 = vmatpush1.msra.mxu0 0.0
        %948 = vmatprep.subr.mxu0 0.0
        %949 = vmatpush1.msra.mxu0 0.0
        %950 = vmatprep.subr.mxu0 0.0
        %951 = vmatpush1.msra.mxu0 0.0
        %952 = vmatprep.subr.mxu0 0.0
        %953 = vmatpush1.msra.mxu0 0.0
        %954 = vmatprep.subr.mxu0 0.0
        %955 = vmatpush1.msra.mxu0 0.0
        %956 = vmatprep.subr.mxu0 0.0
        %957 = vmatpush1.msra.mxu0 0.0
        %958 = vmatprep.subr.mxu0 0.0
        %959 = vmatpush1.msra.mxu0 0.0
        %960 = vmatprep.subr.mxu0 0.0
        %961 = vmatpush1.msra.mxu0 0.0
        %962 = vmatprep.subr.mxu0 0.0
        %963 = vmatpush1.msra.mxu0 0.0
        %964 = vmatprep.subr.mxu0 0.0
        %965 = vmatpush1.msra.mxu0 0.0
        %966 = vmatprep.subr.mxu0 0.0
        %967 = vmatpush1.msra.mxu0 0.0
        %968 = vmatprep.subr.mxu0 0.0
        %969 = vmatpush1.msra.mxu0 0.0
        %970 = vmatprep.subr.mxu0 0.0
        %971 = vmatpush1.msra.mxu0 0.0
        %972 = vmatprep.subr.mxu0 0.0
        %973 = vmatpush1.msra.mxu0 0.0
        %974 = vmatprep.subr.mxu0 0.0
        %975 = vmatpush1.msra.mxu0 0.0
        %976 = vmatprep.subr.mxu0 0.0
        %977 = vmatpush1.msra.mxu0 0.0
        %978 = vmatprep.subr.mxu0 0.0
        %979 = vmatpush1.msra.mxu0 0.0
        %980 = vmatprep.subr.mxu0 0.0
        %981 = vmatpush1.msra.mxu0 0.0
        %982 = vmatprep.subr.mxu0 0.0
        %983 = vmatpush1.msra.mxu0 0.0
        %984 = vmatprep.subr.mxu0 0.0
        %985 = vmatpush1.msra.mxu0 0.0
        %986 = vmatprep.subr.mxu0 0.0
        %987 = vmatpush1.msra.mxu0 0.0
        %988 = vmatprep.subr.mxu0 0.0
        %989 = vmatpush1.msra.mxu0 0.0
        %990 = vmatprep.subr.mxu0 0.0
        %991 = vmatpush1.msra.mxu0 0.0
        %992 = vmatprep.subr.mxu0 0.0
        %993 = vmatpush1.msra.mxu0 0.0
        %994 = vmatprep.subr.mxu0 0.0
        %995 = vmatpush1.msra.mxu0 0.0
        %996 = vmatprep.subr.mxu0 0.0
        %997 = vmatpush1.msra.mxu0 0.0
        %998 = vmatprep.subr.mxu0 0.0
        %999 = vmatpush1.msra.mxu0 0.0
        %1000 = vmatprep.subr.mxu0 0.0
        %1001 = vmatpush1.msra.mxu0 0.0
        %1002 = vmatprep.subr.mxu0 0.0
        %1003 = vmatpush1.msra.mxu0 0.0
        %1004 = vmatprep.subr.mxu0 0.0
        %1005 = vmatpush1.msra.mxu0 0.0
        %1006 = vmatprep.mubr.f32.mxu0 0.0
        %1007 = vmatmul.mubr.f32.gmra.mrb[0].mxu0 %v940
        %v1008 = vpop.f32.mrb[0].mxu0
        %v1009 = vadd.f32 0.0, %v1008
        %v1010 = vpop.f32.mrb[0].mxu0
        %1011 = vdwg.mxu0
        %1012 = vst.msk [vmem:[#allocation5] sm:$0xff] %vm851, %v1009
        %v1013 = vld [vmem:[#allocation2] sm:$0xff]
        %v1014 = vld [vmem:[#allocation3] sm:$0xff]
        %v1015 = vld [vmem:[#allocation4] sm:$0xff]
        %1017 = vrot.lane.b32.xlu0 %v1013, 120
        %v1018 = vpop.permute.xlu0 %1017
        %1020 = vrot.lane.b32.xlu0 %v1014, 120
        %v1021 = vpop.permute.xlu0 %1020
        %v1022 = vsel %vm851, %v1018, 0
        %v1024 = vsel %vm851, %v1021, 0
        %1026 = vmatprep.subr.mxu0 0.0
        %1027 = vmatpush1.xpose.msra.mxu0 %v1024
        %1028 = vmatprep.subr.mxu0 0.0
        %1029 = vmatpush1.xpose.msra.mxu0 0.0
        %1030 = vmatprep.subr.mxu0 0.0
        %1031 = vmatpush1.xpose.msra.mxu0 0.0
        %1032 = vmatprep.subr.mxu0 0.0
        %1033 = vmatpush1.xpose.msra.mxu0 0.0
        %1034 = vmatprep.subr.mxu0 0.0
        %1035 = vmatpush1.xpose.msra.mxu0 0.0
        %1036 = vmatprep.subr.mxu0 0.0
        %1037 = vmatpush1.xpose.msra.mxu0 0.0
        %1038 = vmatprep.subr.mxu0 0.0
        %1039 = vmatpush1.xpose.msra.mxu0 0.0
        %1040 = vmatprep.subr.mxu0 0.0
        %1041 = vmatpush1.xpose.msra.mxu0 0.0
        %1042 = vmatprep.subr.mxu0 0.0
        %1043 = vmatpush1.xpose.msra.mxu0 0.0
        %1044 = vmatprep.subr.mxu0 0.0
        %1045 = vmatpush1.xpose.msra.mxu0 0.0
        %1046 = vmatprep.subr.mxu0 0.0
        %1047 = vmatpush1.xpose.msra.mxu0 0.0
        %1048 = vmatprep.subr.mxu0 0.0
        %1049 = vmatpush1.xpose.msra.mxu0 0.0
        %1050 = vmatprep.subr.mxu0 0.0
        %1051 = vmatpush1.xpose.msra.mxu0 0.0
        %1052 = vmatprep.subr.mxu0 0.0
        %1053 = vmatpush1.xpose.msra.mxu0 0.0
        %1054 = vmatprep.subr.mxu0 0.0
        %1055 = vmatpush1.xpose.msra.mxu0 0.0
        %1056 = vmatprep.subr.mxu0 0.0
        %1057 = vmatpush1.xpose.msra.mxu0 0.0
        %1058 = vmatprep.subr.mxu0 0.0
        %1059 = vmatpush1.xpose.msra.mxu0 0.0
        %1060 = vmatprep.subr.mxu0 0.0
        %1061 = vmatpush1.xpose.msra.mxu0 0.0
        %1062 = vmatprep.subr.mxu0 0.0
        %1063 = vmatpush1.xpose.msra.mxu0 0.0
        %1064 = vmatprep.subr.mxu0 0.0
        %1065 = vmatpush1.xpose.msra.mxu0 0.0
        %1066 = vmatprep.subr.mxu0 0.0
        %1067 = vmatpush1.xpose.msra.mxu0 0.0
        %1068 = vmatprep.subr.mxu0 0.0
        %1069 = vmatpush1.xpose.msra.mxu0 0.0
        %1070 = vmatprep.subr.mxu0 0.0
        %1071 = vmatpush1.xpose.msra.mxu0 0.0
        %1072 = vmatprep.subr.mxu0 0.0
        %1073 = vmatpush1.xpose.msra.mxu0 0.0
        %1074 = vmatprep.subr.mxu0 0.0
        %1075 = vmatpush1.xpose.msra.mxu0 0.0
        %1076 = vmatprep.subr.mxu0 0.0
        %1077 = vmatpush1.xpose.msra.mxu0 0.0
        %1078 = vmatprep.subr.mxu0 0.0
        %1079 = vmatpush1.xpose.msra.mxu0 0.0
        %1080 = vmatprep.subr.mxu0 0.0
        %1081 = vmatpush1.xpose.msra.mxu0 0.0
        %1082 = vmatprep.subr.mxu0 0.0
        %1083 = vmatpush1.xpose.msra.mxu0 0.0
        %1084 = vmatprep.subr.mxu0 0.0
        %1085 = vmatpush1.xpose.msra.mxu0 0.0
        %1086 = vmatprep.subr.mxu0 0.0
        %1087 = vmatpush1.xpose.msra.mxu0 0.0
        %1088 = vmatprep.subr.mxu0 0.0
        %1089 = vmatpush1.xpose.msra.mxu0 0.0
        %1090 = vmatprep.mubr.f32.mxu0 0.0
        %1091 = vmatmul.mubr.f32.gmra.mrb[0].mxu0 %v1022
        %v1092 = vpop.f32.mrb[0].mxu0
        %v1093 = vadd.f32 0.0, %v1092
        %v1094 = vpop.f32.mrb[0].mxu0
        %1095 = vdwg.mxu0
        %v1096 = vsel %vm851, %v1093, -inf
        %1097 = vmax.xlane.f32.xlu0 %v1096
        %v1098 = vpop.xlane.xlu0 %1097
        %v1099 = vsub.f32 %v1093, %v1098
        %v1100 = vmul.f32 %v1099, 1.442695
        %v1101 = vpow.pop %v1100
        %v1102 = vsel %vm851, %v1101, 0.0
        %1103 = vadd.xlane.f32.xlu0 %v1102
        %v1104 = vpop.xlane.xlu0 %1103
        %v1105 = vrcp.pop %v1104
        %v1106 = vmul.f32 %v1101, %v1105
        %1108 = vrot.lane.b32.xlu0 %v1015, 120
        %v1109 = vpop.permute.xlu0 %1108
        %v1112 = vsel %vm851, %v1106, 0
        %1114 = vmatprep.subr.mxu0 0.0
        %1115 = vmatpush1.msra.mxu0 %v1109
        %1116 = vmatprep.subr.mxu0 0.0
        %1117 = vmatpush1.msra.mxu0 0.0
        %1118 = vmatprep.subr.mxu0 0.0
        %1119 = vmatpush1.msra.mxu0 0.0
        %1120 = vmatprep.subr.mxu0 0.0
        %1121 = vmatpush1.msra.mxu0 0.0
        %1122 = vmatprep.subr.mxu0 0.0
        %1123 = vmatpush1.msra.mxu0 0.0
        %1124 = vmatprep.subr.mxu0 0.0
        %1125 = vmatpush1.msra.mxu0 0.0
        %1126 = vmatprep.subr.mxu0 0.0
        %1127 = vmatpush1.msra.mxu0 0.0
        %1128 = vmatprep.subr.mxu0 0.0
        %1129 = vmatpush1.msra.mxu0 0.0
        %1130 = vmatprep.subr.mxu0 0.0
        %1131 = vmatpush1.msra.mxu0 0.0
        %1132 = vmatprep.subr.mxu0 0.0
        %1133 = vmatpush1.msra.mxu0 0.0
        %1134 = vmatprep.subr.mxu0 0.0
        %1135 = vmatpush1.msra.mxu0 0.0
        %1136 = vmatprep.subr.mxu0 0.0
        %1137 = vmatpush1.msra.mxu0 0.0
        %1138 = vmatprep.subr.mxu0 0.0
        %1139 = vmatpush1.msra.mxu0 0.0
        %1140 = vmatprep.subr.mxu0 0.0
        %1141 = vmatpush1.msra.mxu0 0.0
        %1142 = vmatprep.subr.mxu0 0.0
        %1143 = vmatpush1.msra.mxu0 0.0
        %1144 = vmatprep.subr.mxu0 0.0
        %1145 = vmatpush1.msra.mxu0 0.0
        %1146 = vmatprep.subr.mxu0 0.0
        %1147 = vmatpush1.msra.mxu0 0.0
        %1148 = vmatprep.subr.mxu0 0.0
        %1149 = vmatpush1.msra.mxu0 0.0
        %1150 = vmatprep.subr.mxu0 0.0
        %1151 = vmatpush1.msra.mxu0 0.0
        %1152 = vmatprep.subr.mxu0 0.0
        %1153 = vmatpush1.msra.mxu0 0.0
        %1154 = vmatprep.subr.mxu0 0.0
        %1155 = vmatpush1.msra.mxu0 0.0
        %1156 = vmatprep.subr.mxu0 0.0
        %1157 = vmatpush1.msra.mxu0 0.0
        %1158 = vmatprep.subr.mxu0 0.0
        %1159 = vmatpush1.msra.mxu0 0.0
        %1160 = vmatprep.subr.mxu0 0.0
        %1161 = vmatpush1.msra.mxu0 0.0
        %1162 = vmatprep.subr.mxu0 0.0
        %1163 = vmatpush1.msra.mxu0 0.0
        %1164 = vmatprep.subr.mxu0 0.0
        %1165 = vmatpush1.msra.mxu0 0.0
        %1166 = vmatprep.subr.mxu0 0.0
        %1167 = vmatpush1.msra.mxu0 0.0
        %1168 = vmatprep.subr.mxu0 0.0
        %1169 = vmatpush1.msra.mxu0 0.0
        %1170 = vmatprep.subr.mxu0 0.0
        %1171 = vmatpush1.msra.mxu0 0.0
        %1172 = vmatprep.subr.mxu0 0.0
        %1173 = vmatpush1.msra.mxu0 0.0
        %1174 = vmatprep.subr.mxu0 0.0
        %1175 = vmatpush1.msra.mxu0 0.0
        %1176 = vmatprep.subr.mxu0 0.0
        %1177 = vmatpush1.msra.mxu0 0.0
        %1178 = vmatprep.mubr.f32.mxu0 0.0
        %1179 = vmatmul.mubr.f32.gmra.mrb[0].mxu0 %v1112
        %v1180 = vpop.f32.mrb[0].mxu0
        %v1181 = vadd.f32 0.0, %v1180
        %v1182 = vpop.f32.mrb[0].mxu0
        %1183 = vdwg.mxu0
        %1185 = vrot.lane.b32.xlu0 %v1181, 8
        %v1186 = vpop.permute.xlu0 %1185
        %vm1188 = vcmask 130112
        %1189 = vst.msk [vmem:[#allocation5] sm:$0xff] %vm1188, %v1186
        %v1190 = vld [vmem:[#allocation2] sm:$0xff]
        %v1191 = vld [vmem:[#allocation3] sm:$0xff]
        %v1192 = vld [vmem:[#allocation4] sm:$0xff]
        %1194 = vrot.lane.b32.xlu0 %v1190, 112
        %v1195 = vpop.permute.xlu0 %1194
        %1197 = vrot.lane.b32.xlu0 %v1191, 112
        %v1198 = vpop.permute.xlu0 %1197
        %v1199 = vsel %vm851, %v1195, 0
        %v1201 = vsel %vm851, %v1198, 0
        %1203 = vmatprep.subr.mxu0 0.0
        %1204 = vmatpush1.xpose.msra.mxu0 %v1201
        %1205 = vmatprep.subr.mxu0 0.0
        %1206 = vmatpush1.xpose.msra.mxu0 0.0
        %1207 = vmatprep.subr.mxu0 0.0
        %1208 = vmatpush1.xpose.msra.mxu0 0.0
        %1209 = vmatprep.subr.mxu0 0.0
        %1210 = vmatpush1.xpose.msra.mxu0 0.0
        %1211 = vmatprep.subr.mxu0 0.0
        %1212 = vmatpush1.xpose.msra.mxu0 0.0
        %1213 = vmatprep.subr.mxu0 0.0
        %1214 = vmatpush1.xpose.msra.mxu0 0.0
        %1215 = vmatprep.subr.mxu0 0.0
        %1216 = vmatpush1.xpose.msra.mxu0 0.0
        %1217 = vmatprep.subr.mxu0 0.0
        %1218 = vmatpush1.xpose.msra.mxu0 0.0
        %1219 = vmatprep.subr.mxu0 0.0
        %1220 = vmatpush1.xpose.msra.mxu0 0.0
        %1221 = vmatprep.subr.mxu0 0.0
        %1222 = vmatpush1.xpose.msra.mxu0 0.0
        %1223 = vmatprep.subr.mxu0 0.0
        %1224 = vmatpush1.xpose.msra.mxu0 0.0
        %1225 = vmatprep.subr.mxu0 0.0
        %1226 = vmatpush1.xpose.msra.mxu0 0.0
        %1227 = vmatprep.subr.mxu0 0.0
        %1228 = vmatpush1.xpose.msra.mxu0 0.0
        %1229 = vmatprep.subr.mxu0 0.0
        %1230 = vmatpush1.xpose.msra.mxu0 0.0
        %1231 = vmatprep.subr.mxu0 0.0
        %1232 = vmatpush1.xpose.msra.mxu0 0.0
        %1233 = vmatprep.subr.mxu0 0.0
        %1234 = vmatpush1.xpose.msra.mxu0 0.0
        %1235 = vmatprep.subr.mxu0 0.0
        %1236 = vmatpush1.xpose.msra.mxu0 0.0
        %1237 = vmatprep.subr.mxu0 0.0
        %1238 = vmatpush1.xpose.msra.mxu0 0.0
        %1239 = vmatprep.subr.mxu0 0.0
        %1240 = vmatpush1.xpose.msra.mxu0 0.0
        %1241 = vmatprep.subr.mxu0 0.0
        %1242 = vmatpush1.xpose.msra.mxu0 0.0
        %1243 = vmatprep.subr.mxu0 0.0
        %1244 = vmatpush1.xpose.msra.mxu0 0.0
        %1245 = vmatprep.subr.mxu0 0.0
        %1246 = vmatpush1.xpose.msra.mxu0 0.0
        %1247 = vmatprep.subr.mxu0 0.0
        %1248 = vmatpush1.xpose.msra.mxu0 0.0
        %1249 = vmatprep.subr.mxu0 0.0
        %1250 = vmatpush1.xpose.msra.mxu0 0.0
        %1251 = vmatprep.subr.mxu0 0.0
        %1252 = vmatpush1.xpose.msra.mxu0 0.0
        %1253 = vmatprep.subr.mxu0 0.0
        %1254 = vmatpush1.xpose.msra.mxu0 0.0
        %1255 = vmatprep.subr.mxu0 0.0
        %1256 = vmatpush1.xpose.msra.mxu0 0.0
        %1257 = vmatprep.subr.mxu0 0.0
        %1258 = vmatpush1.xpose.msra.mxu0 0.0
        %1259 = vmatprep.subr.mxu0 0.0
        %1260 = vmatpush1.xpose.msra.mxu0 0.0
        %1261 = vmatprep.subr.mxu0 0.0
        %1262 = vmatpush1.xpose.msra.mxu0 0.0
        %1263 = vmatprep.subr.mxu0 0.0
        %1264 = vmatpush1.xpose.msra.mxu0 0.0
        %1265 = vmatprep.subr.mxu0 0.0
        %1266 = vmatpush1.xpose.msra.mxu0 0.0
        %1267 = vmatprep.mubr.f32.mxu0 0.0
        %1268 = vmatmul.mubr.f32.gmra.mrb[0].mxu0 %v1199
        %v1269 = vpop.f32.mrb[0].mxu0
        %v1270 = vadd.f32 0.0, %v1269
        %v1271 = vpop.f32.mrb[0].mxu0
        %1272 = vdwg.mxu0
        %v1273 = vsel %vm851, %v1270, -inf
        %1274 = vmax.xlane.f32.xlu0 %v1273
        %v1275 = vpop.xlane.xlu0 %1274
        %v1276 = vsub.f32 %v1270, %v1275
        %v1277 = vmul.f32 %v1276, 1.442695
        %v1278 = vpow.pop %v1277
        %v1279 = vsel %vm851, %v1278, 0.0
        %1280 = vadd.xlane.f32.xlu0 %v1279
        %v1281 = vpop.xlane.xlu0 %1280
        %v1282 = vrcp.pop %v1281
        %v1283 = vmul.f32 %v1278, %v1282
        %1285 = vrot.lane.b32.xlu0 %v1192, 112
        %v1286 = vpop.permute.xlu0 %1285
        %v1289 = vsel %vm851, %v1283, 0
        %1291 = vmatprep.subr.mxu0 0.0
        %1292 = vmatpush1.msra.mxu0 %v1286
        %1293 = vmatprep.subr.mxu0 0.0
        %1294 = vmatpush1.msra.mxu0 0.0
        %1295 = vmatprep.subr.mxu0 0.0
        %1296 = vmatpush1.msra.mxu0 0.0
        %1297 = vmatprep.subr.mxu0 0.0
        %1298 = vmatpush1.msra.mxu0 0.0
        %1299 = vmatprep.subr.mxu0 0.0
        %1300 = vmatpush1.msra.mxu0 0.0
        %1301 = vmatprep.subr.mxu0 0.0
        %1302 = vmatpush1.msra.mxu0 0.0
        %1303 = vmatprep.subr.mxu0 0.0
        %1304 = vmatpush1.msra.mxu0 0.0
        %1305 = vmatprep.subr.mxu0 0.0
        %1306 = vmatpush1.msra.mxu0 0.0
        %1307 = vmatprep.subr.mxu0 0.0
        %1308 = vmatpush1.msra.mxu0 0.0
        %1309 = vmatprep.subr.mxu0 0.0
        %1310 = vmatpush1.msra.mxu0 0.0
        %1311 = vmatprep.subr.mxu0 0.0
        %1312 = vmatpush1.msra.mxu0 0.0
        %1313 = vmatprep.subr.mxu0 0.0
        %1314 = vmatpush1.msra.mxu0 0.0
        %1315 = vmatprep.subr.mxu0 0.0
        %1316 = vmatpush1.msra.mxu0 0.0
        %1317 = vmatprep.subr.mxu0 0.0
        %1318 = vmatpush1.msra.mxu0 0.0
        %1319 = vmatprep.subr.mxu0 0.0
        %1320 = vmatpush1.msra.mxu0 0.0
        %1321 = vmatprep.subr.mxu0 0.0
        %1322 = vmatpush1.msra.mxu0 0.0
        %1323 = vmatprep.subr.mxu0 0.0
        %1324 = vmatpush1.msra.mxu0 0.0
        %1325 = vmatprep.subr.mxu0 0.0
        %1326 = vmatpush1.msra.mxu0 0.0
        %1327 = vmatprep.subr.mxu0 0.0
        %1328 = vmatpush1.msra.mxu0 0.0
        %1329 = vmatprep.subr.mxu0 0.0
        %1330 = vmatpush1.msra.mxu0 0.0
        %1331 = vmatprep.subr.mxu0 0.0
        %1332 = vmatpush1.msra.mxu0 0.0
        %1333 = vmatprep.subr.mxu0 0.0
        %1334 = vmatpush1.msra.mxu0 0.0
        %1335 = vmatprep.subr.mxu0 0.0
        %1336 = vmatpush1.msra.mxu0 0.0
        %1337 = vmatprep.subr.mxu0 0.0
        %1338 = vmatpush1.msra.mxu0 0.0
        %1339 = vmatprep.subr.mxu0 0.0
        %1340 = vmatpush1.msra.mxu0 0.0
        %1341 = vmatprep.subr.mxu0 0.0
        %1342 = vmatpush1.msra.mxu0 0.0
        %1343 = vmatprep.subr.mxu0 0.0
        %1344 = vmatpush1.msra.mxu0 0.0
        %1345 = vmatprep.subr.mxu0 0.0
        %1346 = vmatpush1.msra.mxu0 0.0
        %1347 = vmatprep.subr.mxu0 0.0
        %1348 = vmatpush1.msra.mxu0 0.0
        %1349 = vmatprep.subr.mxu0 0.0
        %1350 = vmatpush1.msra.mxu0 0.0
        %1351 = vmatprep.subr.mxu0 0.0
        %1352 = vmatpush1.msra.mxu0 0.0
        %1353 = vmatprep.subr.mxu0 0.0
        %1354 = vmatpush1.msra.mxu0 0.0
        %1355 = vmatprep.mubr.f32.mxu0 0.0
        %1356 = vmatmul.mubr.f32.gmra.mrb[0].mxu0 %v1289
        %v1357 = vpop.f32.mrb[0].mxu0
        %v1358 = vadd.f32 0.0, %v1357
        %v1359 = vpop.f32.mrb[0].mxu0
        %1360 = vdwg.mxu0
        %1362 = vrot.lane.b32.xlu0 %v1358, 16
        %v1363 = vpop.permute.xlu0 %1362
        %vm1365 = vcmask 195712
        %1366 = vst.msk [vmem:[#allocation5] sm:$0xff] %vm1365, %v1363
        %v1367 = vld [vmem:[#allocation2] sm:$0xff]
        %v1368 = vld [vmem:[#allocation3] sm:$0xff]
        %v1369 = vld [vmem:[#allocation4] sm:$0xff]
        %1371 = vrot.lane.b32.xlu0 %v1367, 104
        %v1372 = vpop.permute.xlu0 %1371
        %1374 = vrot.lane.b32.xlu0 %v1368, 104
        %v1375 = vpop.permute.xlu0 %1374
        %v1376 = vsel %vm851, %v1372, 0
        %v1378 = vsel %vm851, %v1375, 0
        %1380 = vmatprep.subr.mxu0 0.0
        %1381 = vmatpush1.xpose.msra.mxu0 %v1378
        %1382 = vmatprep.subr.mxu0 0.0
        %1383 = vmatpush1.xpose.msra.mxu0 0.0
        %1384 = vmatprep.subr.mxu0 0.0
        %1385 = vmatpush1.xpose.msra.mxu0 0.0
        %1386 = vmatprep.subr.mxu0 0.0
        %1387 = vmatpush1.xpose.msra.mxu0 0.0
        %1388 = vmatprep.subr.mxu0 0.0
        %1389 = vmatpush1.xpose.msra.mxu0 0.0
        %1390 = vmatprep.subr.mxu0 0.0
        %1391 = vmatpush1.xpose.msra.mxu0 0.0
        %1392 = vmatprep.subr.mxu0 0.0
        %1393 = vmatpush1.xpose.msra.mxu0 0.0
        %1394 = vmatprep.subr.mxu0 0.0
        %1395 = vmatpush1.xpose.msra.mxu0 0.0
        %1396 = vmatprep.subr.mxu0 0.0
        %1397 = vmatpush1.xpose.msra.mxu0 0.0
        %1398 = vmatprep.subr.mxu0 0.0
        %1399 = vmatpush1.xpose.msra.mxu0 0.0
        %1400 = vmatprep.subr.mxu0 0.0
        %1401 = vmatpush1.xpose.msra.mxu0 0.0
        %1402 = vmatprep.subr.mxu0 0.0
        %1403 = vmatpush1.xpose.msra.mxu0 0.0
        %1404 = vmatprep.subr.mxu0 0.0
        %1405 = vmatpush1.xpose.msra.mxu0 0.0
        %1406 = vmatprep.subr.mxu0 0.0
        %1407 = vmatpush1.xpose.msra.mxu0 0.0
        %1408 = vmatprep.subr.mxu0 0.0
        %1409 = vmatpush1.xpose.msra.mxu0 0.0
        %1410 = vmatprep.subr.mxu0 0.0
        %1411 = vmatpush1.xpose.msra.mxu0 0.0
        %1412 = vmatprep.subr.mxu0 0.0
        %1413 = vmatpush1.xpose.msra.mxu0 0.0
        %1414 = vmatprep.subr.mxu0 0.0
        %1415 = vmatpush1.xpose.msra.mxu0 0.0
        %1416 = vmatprep.subr.mxu0 0.0
        %1417 = vmatpush1.xpose.msra.mxu0 0.0
        %1418 = vmatprep.subr.mxu0 0.0
        %1419 = vmatpush1.xpose.msra.mxu0 0.0
        %1420 = vmatprep.subr.mxu0 0.0
        %1421 = vmatpush1.xpose.msra.mxu0 0.0
        %1422 = vmatprep.subr.mxu0 0.0
        %1423 = vmatpush1.xpose.msra.mxu0 0.0
        %1424 = vmatprep.subr.mxu0 0.0
        %1425 = vmatpush1.xpose.msra.mxu0 0.0
        %1426 = vmatprep.subr.mxu0 0.0
        %1427 = vmatpush1.xpose.msra.mxu0 0.0
        %1428 = vmatprep.subr.mxu0 0.0
        %1429 = vmatpush1.xpose.msra.mxu0 0.0
        %1430 = vmatprep.subr.mxu0 0.0
        %1431 = vmatpush1.xpose.msra.mxu0 0.0
        %1432 = vmatprep.subr.mxu0 0.0
        %1433 = vmatpush1.xpose.msra.mxu0 0.0
        %1434 = vmatprep.subr.mxu0 0.0
        %1435 = vmatpush1.xpose.msra.mxu0 0.0
        %1436 = vmatprep.subr.mxu0 0.0
        %1437 = vmatpush1.xpose.msra.mxu0 0.0
        %1438 = vmatprep.subr.mxu0 0.0
        %1439 = vmatpush1.xpose.msra.mxu0 0.0
        %1440 = vmatprep.subr.mxu0 0.0
        %1441 = vmatpush1.xpose.msra.mxu0 0.0
        %1442 = vmatprep.subr.mxu0 0.0
        %1443 = vmatpush1.xpose.msra.mxu0 0.0
        %1444 = vmatprep.mubr.f32.mxu0 0.0
        %1445 = vmatmul.mubr.f32.gmra.mrb[0].mxu0 %v1376
        %v1446 = vpop.f32.mrb[0].mxu0
        %v1447 = vadd.f32 0.0, %v1446
        %v1448 = vpop.f32.mrb[0].mxu0
        %1449 = vdwg.mxu0
        %v1450 = vsel %vm851, %v1447, -inf
        %1451 = vmax.xlane.f32.xlu0 %v1450
        %v1452 = vpop.xlane.xlu0 %1451
        %v1453 = vsub.f32 %v1447, %v1452
        %v1454 = vmul.f32 %v1453, 1.442695
        %v1455 = vpow.pop %v1454
        %v1456 = vsel %vm851, %v1455, 0.0
        %1457 = vadd.xlane.f32.xlu0 %v1456
        %v1458 = vpop.xlane.xlu0 %1457
        %v1459 = vrcp.pop %v1458
        %v1460 = vmul.f32 %v1455, %v1459
        %1462 = vrot.lane.b32.xlu0 %v1369, 104
        %v1463 = vpop.permute.xlu0 %1462
        %v1466 = vsel %vm851, %v1460, 0
        %1468 = vmatprep.subr.mxu0 0.0
        %1469 = vmatpush1.msra.mxu0 %v1463
        %1470 = vmatprep.subr.mxu0 0.0
        %1471 = vmatpush1.msra.mxu0 0.0
        %1472 = vmatprep.subr.mxu0 0.0
        %1473 = vmatpush1.msra.mxu0 0.0
        %1474 = vmatprep.subr.mxu0 0.0
        %1475 = vmatpush1.msra.mxu0 0.0
        %1476 = vmatprep.subr.mxu0 0.0
        %1477 = vmatpush1.msra.mxu0 0.0
        %1478 = vmatprep.subr.mxu0 0.0
        %1479 = vmatpush1.msra.mxu0 0.0
        %1480 = vmatprep.subr.mxu0 0.0
        %1481 = vmatpush1.msra.mxu0 0.0
        %1482 = vmatprep.subr.mxu0 0.0
        %1483 = vmatpush1.msra.mxu0 0.0
        %1484 = vmatprep.subr.mxu0 0.0
        %1485 = vmatpush1.msra.mxu0 0.0
        %1486 = vmatprep.subr.mxu0 0.0
        %1487 = vmatpush1.msra.mxu0 0.0
        %1488 = vmatprep.subr.mxu0 0.0
        %1489 = vmatpush1.msra.mxu0 0.0
        %1490 = vmatprep.subr.mxu0 0.0
        %1491 = vmatpush1.msra.mxu0 0.0
        %1492 = vmatprep.subr.mxu0 0.0
        %1493 = vmatpush1.msra.mxu0 0.0
        %1494 = vmatprep.subr.mxu0 0.0
        %1495 = vmatpush1.msra.mxu0 0.0
        %1496 = vmatprep.subr.mxu0 0.0
        %1497 = vmatpush1.msra.mxu0 0.0
        %1498 = vmatprep.subr.mxu0 0.0
        %1499 = vmatpush1.msra.mxu0 0.0
        %1500 = vmatprep.subr.mxu0 0.0
        %1501 = vmatpush1.msra.mxu0 0.0
        %1502 = vmatprep.subr.mxu0 0.0
        %1503 = vmatpush1.msra.mxu0 0.0
        %1504 = vmatprep.subr.mxu0 0.0
        %1505 = vmatpush1.msra.mxu0 0.0
        %1506 = vmatprep.subr.mxu0 0.0
        %1507 = vmatpush1.msra.mxu0 0.0
        %1508 = vmatprep.subr.mxu0 0.0
        %1509 = vmatpush1.msra.mxu0 0.0
        %1510 = vmatprep.subr.mxu0 0.0
        %1511 = vmatpush1.msra.mxu0 0.0
        %1512 = vmatprep.subr.mxu0 0.0
        %1513 = vmatpush1.msra.mxu0 0.0
        %1514 = vmatprep.subr.mxu0 0.0
        %1515 = vmatpush1.msra.mxu0 0.0
        %1516 = vmatprep.subr.mxu0 0.0
        %1517 = vmatpush1.msra.mxu0 0.0
        %1518 = vmatprep.subr.mxu0 0.0
        %1519 = vmatpush1.msra.mxu0 0.0
        %1520 = vmatprep.subr.mxu0 0.0
        %1521 = vmatpush1.msra.mxu0 0.0
        %1522 = vmatprep.subr.mxu0 0.0
        %1523 = vmatpush1.msra.mxu0 0.0
        %1524 = vmatprep.subr.mxu0 0.0
        %1525 = vmatpush1.msra.mxu0 0.0
        %1526 = vmatprep.subr.mxu0 0.0
        %1527 = vmatpush1.msra.mxu0 0.0
        %1528 = vmatprep.subr.mxu0 0.0
        %1529 = vmatpush1.msra.mxu0 0.0
        %1530 = vmatprep.subr.mxu0 0.0
        %1531 = vmatpush1.msra.mxu0 0.0
        %1532 = vmatprep.mubr.f32.mxu0 0.0
        %1533 = vmatmul.mubr.f32.gmra.mrb[0].mxu0 %v1466
        %v1534 = vpop.f32.mrb[0].mxu0
        %v1535 = vadd.f32 0.0, %v1534
        %v1536 = vpop.f32.mrb[0].mxu0
        %1537 = vdwg.mxu0
        %1539 = vrot.lane.b32.xlu0 %v1535, 24
        %v1540 = vpop.permute.xlu0 %1539
        %vm1542 = vcmask 261312
        %1543 = vst.msk [vmem:[#allocation5] sm:$0xff] %vm1542, %v1540
        %v1544 = vld [vmem:[#allocation5] sm:$0xff]
        %v1545 = vld [vmem:[#allocation14] sm:$0xff]
        %v1546 = vld [vmem:[#allocation14 + $0x8] sm:$0xff]
        %v1547 = vld [vmem:[#allocation14 + $0x10] sm:$0xff]
        %v1548 = vld [vmem:[#allocation14 + $0x18] sm:$0xff]
        %v1550 = vsel %vm623, %v1544, 0
        %1552 = vmatprep.subr.mxu0 0.0
        %1553 = vmatpush1.msra.mxu0 %v1545
        %1554 = vmatprep.subr.mxu0 0.0
        %1555 = vmatpush1.msra.mxu0 %v1546
        %1556 = vmatprep.subr.mxu0 0.0
        %1557 = vmatpush1.msra.mxu0 %v1547
        %1558 = vmatprep.subr.mxu0 0.0
        %1559 = vmatpush1.msra.mxu0 %v1548
        %1560 = vmatprep.subr.mxu0 0.0
        %1561 = vmatpush1.msra.mxu0 0.0
        %1562 = vmatprep.subr.mxu0 0.0
        %1563 = vmatpush1.msra.mxu0 0.0
        %1564 = vmatprep.subr.mxu0 0.0
        %1565 = vmatpush1.msra.mxu0 0.0
        %1566 = vmatprep.subr.mxu0 0.0
        %1567 = vmatpush1.msra.mxu0 0.0
        %1568 = vmatprep.subr.mxu0 0.0
        %1569 = vmatpush1.msra.mxu0 0.0
        %1570 = vmatprep.subr.mxu0 0.0
        %1571 = vmatpush1.msra.mxu0 0.0
        %1572 = vmatprep.subr.mxu0 0.0
        %1573 = vmatpush1.msra.mxu0 0.0
        %1574 = vmatprep.subr.mxu0 0.0
        %1575 = vmatpush1.msra.mxu0 0.0
        %1576 = vmatprep.subr.mxu0 0.0
        %1577 = vmatpush1.msra.mxu0 0.0
        %1578 = vmatprep.subr.mxu0 0.0
        %1579 = vmatpush1.msra.mxu0 0.0
        %1580 = vmatprep.subr.mxu0 0.0
        %1581 = vmatpush1.msra.mxu0 0.0
        %1582 = vmatprep.subr.mxu0 0.0
        %1583 = vmatpush1.msra.mxu0 0.0
        %1584 = vmatprep.subr.mxu0 0.0
        %1585 = vmatpush1.msra.mxu0 0.0
        %1586 = vmatprep.subr.mxu0 0.0
        %1587 = vmatpush1.msra.mxu0 0.0
        %1588 = vmatprep.subr.mxu0 0.0
        %1589 = vmatpush1.msra.mxu0 0.0
        %1590 = vmatprep.subr.mxu0 0.0
        %1591 = vmatpush1.msra.mxu0 0.0
        %1592 = vmatprep.subr.mxu0 0.0
        %1593 = vmatpush1.msra.mxu0 0.0
        %1594 = vmatprep.subr.mxu0 0.0
        %1595 = vmatpush1.msra.mxu0 0.0
        %1596 = vmatprep.subr.mxu0 0.0
        %1597 = vmatpush1.msra.mxu0 0.0
        %1598 = vmatprep.subr.mxu0 0.0
        %1599 = vmatpush1.msra.mxu0 0.0
        %1600 = vmatprep.subr.mxu0 0.0
        %1601 = vmatpush1.msra.mxu0 0.0
        %1602 = vmatprep.subr.mxu0 0.0
        %1603 = vmatpush1.msra.mxu0 0.0
        %1604 = vmatprep.subr.mxu0 0.0
        %1605 = vmatpush1.msra.mxu0 0.0
        %1606 = vmatprep.subr.mxu0 0.0
        %1607 = vmatpush1.msra.mxu0 0.0
        %1608 = vmatprep.subr.mxu0 0.0
        %1609 = vmatpush1.msra.mxu0 0.0
        %1610 = vmatprep.subr.mxu0 0.0
        %1611 = vmatpush1.msra.mxu0 0.0
        %1612 = vmatprep.subr.mxu0 0.0
        %1613 = vmatpush1.msra.mxu0 0.0
        %1614 = vmatprep.subr.mxu0 0.0
        %1615 = vmatpush1.msra.mxu0 0.0
        %1616 = vmatprep.mubr.f32.mxu0 0.0
        %1617 = vmatmul.mubr.f32.gmra.mrb[0].mxu0 %v1550
        %v1618 = vpop.f32.mrb[0].mxu0
        %v1619 = vadd.f32 0.0, %v1618
        %v1620 = vpop.f32.mrb[0].mxu0
        %1621 = vdwg.mxu0
        %v1622 = vadd.f32 %v618, %v1619
        %v1623 = vld [vmem:[#allocation21] sm:$0x1]
        %v1624 = vld [vmem:[#allocation23] sm:$0x1]
        %v1625 = vsel %vm623, %v1622, 0.0
        %1626 = vadd.xlane.f32.xlu0 %v1625
        %v1627 = vpop.xlane.xlu0 %1626
        %v1628 = vrcp.pop 32.0
        %v1629 = vmul.f32 %v1627, %v1628
        %v1630 = vsub.f32 %v1622, %v1629
        %v1631 = vmul.f32 %v1630, %v1630
        %v1632 = vsel %vm623, %v1631, 0.0
        %1633 = vadd.xlane.f32.xlu0 %v1632
        %v1634 = vpop.xlane.xlu0 %1633
        %v1635 = vmul.f32 %v1634, %v1628
        %v1636 = vadd.f32 %v1635, 1e-05
        %v1637 = vrsqrt.pop %v1636
        %v1638 = vmul.f32 %v1630, %v1637
        %v1640 = vlaneseq
        %v1641 = vshrl.u32 %v1640, 7
        %v1642 = vsub.s32 0, %v1641
        %v1643 = vrot.slane %v1623, %v1642
        %v1645 = vmul.f32 %v1638, %v1643
        %v1647 = vlaneseq
        %v1648 = vshrl.u32 %v1647, 7
        %v1649 = vsub.s32 0, %v1648
        %v1650 = vrot.slane %v1624, %v1649
        %v1652 = vadd.f32 %v1645, %v1650
        %v1653 = vld [vmem:[#allocation15] sm:$0xff]
        %v1654 = vld [vmem:[#allocation15 + $0x8] sm:$0xff]
        %v1655 = vld [vmem:[#allocation15 + $0x10] sm:$0xff]
        %v1656 = vld [vmem:[#allocation15 + $0x18] sm:$0xff]
        %v1657 = vld [vmem:[#allocation17] sm:$0x1]
        %v1659 = vlaneseq
        %v1660 = vshrl.u32 %v1659, 7
        %v1661 = vsub.s32 0, %v1660
        %v1662 = vrot.slane %v1657, %v1661
        %v1665 = vsel %vm623, %v1652, 0
        %1667 = vmatprep.subr.mxu0 0.0
        %1668 = vmatpush1.msra.mxu0 %v1653
        %1669 = vmatprep.subr.mxu0 0.0
        %1670 = vmatpush1.msra.mxu0 %v1654
        %1671 = vmatprep.subr.mxu0 0.0
        %1672 = vmatpush1.msra.mxu0 %v1655
        %1673 = vmatprep.subr.mxu0 0.0
        %1674 = vmatpush1.msra.mxu0 %v1656
        %1675 = vmatprep.subr.mxu0 0.0
        %1676 = vmatpush1.msra.mxu0 0.0
        %1677 = vmatprep.subr.mxu0 0.0
        %1678 = vmatpush1.msra.mxu0 0.0
        %1679 = vmatprep.subr.mxu0 0.0
        %1680 = vmatpush1.msra.mxu0 0.0
        %1681 = vmatprep.subr.mxu0 0.0
        %1682 = vmatpush1.msra.mxu0 0.0
        %1683 = vmatprep.subr.mxu0 0.0
        %1684 = vmatpush1.msra.mxu0 0.0
        %1685 = vmatprep.subr.mxu0 0.0
        %1686 = vmatpush1.msra.mxu0 0.0
        %1687 = vmatprep.subr.mxu0 0.0
        %1688 = vmatpush1.msra.mxu0 0.0
        %1689 = vmatprep.subr.mxu0 0.0
        %1690 = vmatpush1.msra.mxu0 0.0
        %1691 = vmatprep.subr.mxu0 0.0
        %1692 = vmatpush1.msra.mxu0 0.0
        %1693 = vmatprep.subr.mxu0 0.0
        %1694 = vmatpush1.msra.mxu0 0.0
        %1695 = vmatprep.subr.mxu0 0.0
        %1696 = vmatpush1.msra.mxu0 0.0
        %1697 = vmatprep.subr.mxu0 0.0
        %1698 = vmatpush1.msra.mxu0 0.0
        %1699 = vmatprep.subr.mxu0 0.0
        %1700 = vmatpush1.msra.mxu0 0.0
        %1701 = vmatprep.subr.mxu0 0.0
        %1702 = vmatpush1.msra.mxu0 0.0
        %1703 = vmatprep.subr.mxu0 0.0
        %1704 = vmatpush1.msra.mxu0 0.0
        %1705 = vmatprep.subr.mxu0 0.0
        %1706 = vmatpush1.msra.mxu0 0.0
        %1707 = vmatprep.subr.mxu0 0.0
        %1708 = vmatpush1.msra.mxu0 0.0
        %1709 = vmatprep.subr.mxu0 0.0
        %1710 = vmatpush1.msra.mxu0 0.0
        %1711 = vmatprep.subr.mxu0 0.0
        %1712 = vmatpush1.msra.mxu0 0.0
        %1713 = vmatprep.subr.mxu0 0.0
        %1714 = vmatpush1.msra.mxu0 0.0
        %1715 = vmatprep.subr.mxu0 0.0
        %1716 = vmatpush1.msra.mxu0 0.0
        %1717 = vmatprep.subr.mxu0 0.0
        %1718 = vmatpush1.msra.mxu0 0.0
        %1719 = vmatprep.subr.mxu0 0.0
        %1720 = vmatpush1.msra.mxu0 0.0
        %1721 = vmatprep.subr.mxu0 0.0
        %1722 = vmatpush1.msra.mxu0 0.0
        %1723 = vmatprep.subr.mxu0 0.0
        %1724 = vmatpush1.msra.mxu0 0.0
        %1725 = vmatprep.subr.mxu0 0.0
        %1726 = vmatpush1.msra.mxu0 0.0
        %1727 = vmatprep.subr.mxu0 0.0
        %1728 = vmatpush1.msra.mxu0 0.0
        %1729 = vmatprep.subr.mxu0 0.0
        %1730 = vmatpush1.msra.mxu0 0.0
        %1731 = vmatprep.mubr.f32.mxu0 0.0
        %1732 = vmatmul.mubr.f32.gmra.mrb[0].mxu0 %v1665
        %v1733 = vpop.f32.mrb[0].mxu0
        %v1734 = vadd.f32 %v1662, %v1733
        %v1735 = vpop.f32.mrb[0].mxu0
        %1736 = vdwg.mxu0
        %v1737 = vmax.f32 %v1734, 0.0
        %v1738 = vld [vmem:[#allocation18] sm:$0xff]
        %v1739 = vld [vmem:[#allocation18 + $0x8] sm:$0xff]
        %v1740 = vld [vmem:[#allocation18 + $0x10] sm:$0xff]
        %v1741 = vld [vmem:[#allocation18 + $0x18] sm:$0xff]
        %v1742 = vld [vmem:[#allocation18 + $0x20] sm:$0xff]
        %v1743 = vld [vmem:[#allocation18 + $0x28] sm:$0xff]
        %v1744 = vld [vmem:[#allocation18 + $0x30] sm:$0xff]
        %v1745 = vld [vmem:[#allocation18 + $0x38] sm:$0xff]
        %v1746 = vld [vmem:[#allocation20] sm:$0x1]
        %v1748 = vlaneseq
        %v1749 = vshrl.u32 %v1748, 7
        %v1750 = vsub.s32 0, %v1749
        %v1751 = vrot.slane %v1746, %v1750
        %vm1753 = vcmask 523264
        %v1755 = vsel %vm1753, %v1737, 0
        %1757 = vmatprep.subr.mxu0 0.0
        %1758 = vmatpush1.msra.mxu0 %v1738
        %1759 = vmatprep.subr.mxu0 0.0
        %1760 = vmatpush1.msra.mxu0 %v1739
        %1761 = vmatprep.subr.mxu0 0.0
        %1762 = vmatpush1.msra.mxu0 %v1740
        %1763 = vmatprep.subr.mxu0 0.0
        %1764 = vmatpush1.msra.mxu0 %v1741
        %1765 = vmatprep.subr.mxu0 0.0
        %1766 = vmatpush1.msra.mxu0 %v1742
        %1767 = vmatprep.subr.mxu0 0.0
        %1768 = vmatpush1.msra.mxu0 %v1743
        %1769 = vmatprep.subr.mxu0 0.0
        %1770 = vmatpush1.msra.mxu0 %v1744
        %1771 = vmatprep.subr.mxu0 0.0
        %1772 = vmatpush1.msra.mxu0 %v1745
        %1773 = vmatprep.subr.mxu0 0.0
        %1774 = vmatpush1.msra.mxu0 0.0
        %1775 = vmatprep.subr.mxu0 0.0
        %1776 = vmatpush1.msra.mxu0 0.0
        %1777 = vmatprep.subr.mxu0 0.0
        %1778 = vmatpush1.msra.mxu0 0.0
        %1779 = vmatprep.subr.mxu0 0.0
        %1780 = vmatpush1.msra.mxu0 0.0
        %1781 = vmatprep.subr.mxu0 0.0
        %1782 = vmatpush1.msra.mxu0 0.0
        %1783 = vmatprep.subr.mxu0 0.0
        %1784 = vmatpush1.msra.mxu0 0.0
        %1785 = vmatprep.subr.mxu0 0.0
        %1786 = vmatpush1.msra.mxu0 0.0
        %1787 = vmatprep.subr.mxu0 0.0
        %1788 = vmatpush1.msra.mxu0 0.0
        %1789 = vmatprep.subr.mxu0 0.0
        %1790 = vmatpush1.msra.mxu0 0.0
        %1791 = vmatprep.subr.mxu0 0.0
        %1792 = vmatpush1.msra.mxu0 0.0
        %1793 = vmatprep.subr.mxu0 0.0
        %1794 = vmatpush1.msra.mxu0 0.0
        %1795 = vmatprep.subr.mxu0 0.0
        %1796 = vmatpush1.msra.mxu0 0.0
        %1797 = vmatprep.subr.mxu0 0.0
        %1798 = vmatpush1.msra.mxu0 0.0
        %1799 = vmatprep.subr.mxu0 0.0
        %1800 = vmatpush1.msra.mxu0 0.0
        %1801 = vmatprep.subr.mxu0 0.0
        %1802 = vmatpush1.msra.mxu0 0.0
        %1803 = vmatprep.subr.mxu0 0.0
        %1804 = vmatpush1.msra.mxu0 0.0
        %1805 = vmatprep.subr.mxu0 0.0
        %1806 = vmatpush1.msra.mxu0 0.0
        %1807 = vmatprep.subr.mxu0 0.0
        %1808 = vmatpush1.msra.mxu0 0.0
        %1809 = vmatprep.subr.mxu0 0.0
        %1810 = vmatpush1.msra.mxu0 0.0
        %1811 = vmatprep.subr.mxu0 0.0
        %1812 = vmatpush1.msra.mxu0 0.0
        %1813 = vmatprep.subr.mxu0 0.0
        %1814 = vmatpush1.msra.mxu0 0.0
        %1815 = vmatprep.subr.mxu0 0.0
        %1816 = vmatpush1.msra.mxu0 0.0
        %1817 = vmatprep.subr.mxu0 0.0
        %1818 = vmatpush1.msra.mxu0 0.0
        %1819 = vmatprep.subr.mxu0 0.0
        %1820 = vmatpush1.msra.mxu0 0.0
        %1821 = vmatprep.mubr.f32.mxu0 0.0
        %1822 = vmatmul.mubr.f32.gmra.mrb[0].mxu0 %v1755
        %v1823 = vpop.f32.mrb[0].mxu0
        %v1824 = vadd.f32 %v1751, %v1823
        %v1825 = vpop.f32.mrb[0].mxu0
        %1826 = vdwg.mxu0
        %v1827 = vadd.f32 %v1652, %v1824
        %v1828 = vld [vmem:[#allocation24] sm:$0x1]
        %v1829 = vld [vmem:[#allocation26] sm:$0x1]
        %v1830 = vsel %vm623, %v1827, 0.0
        %1831 = vadd.xlane.f32.xlu0 %v1830
        %v1832 = vpop.xlane.xlu0 %1831
        %v1833 = vmul.f32 %v1832, %v1628
        %v1834 = vsub.f32 %v1827, %v1833
        %v1835 = vmul.f32 %v1834, %v1834
        %v1836 = vsel %vm623, %v1835, 0.0
        %1837 = vadd.xlane.f32.xlu0 %v1836
        %v1838 = vpop.xlane.xlu0 %1837
        %v1839 = vmul.f32 %v1838, %v1628
        %v1840 = vadd.f32 %v1839, 1e-05
        %v1841 = vrsqrt.pop %v1840
        %v1842 = vmul.f32 %v1834, %v1841
        %v1844 = vlaneseq
        %v1845 = vshrl.u32 %v1844, 7
        %v1846 = vsub.s32 0, %v1845
        %v1847 = vrot.slane %v1828, %v1846
        %v1849 = vmul.f32 %v1842, %v1847
        %v1851 = vlaneseq
        %v1852 = vshrl.u32 %v1851, 7
        %v1853 = vsub.s32 0, %v1852
        %v1854 = vrot.slane %v1829, %v1853
        %v1856 = vadd.f32 %v1849, %v1854
        %1857 = vst.msk [vmem:[%s617] sm:$0xff] %vm623, %v1856
        %s1858 = sand.u32 %s322, 1
        %s1859 = scalar_lea.sflag [#allocation8], %s1858
        %s1860 = sand.u32 %s322, 1
        %s1861 = smul.addr %s1860, 8
        %s1862 = scalar_lea.vmem [#allocation27], %s1861
        // Predicated region
        $region125: #{tpu_custom_call.1} parent=71 // pred_check
          %p1863 = pneg %p332
        $region126: #{tpu_custom_call.1} parent=71 // pred_check_branch
          %1865 = sbr.rel (%p1863) target = $region128
        $region127: #{tpu_custom_call.1} parent=71 // pred_region
          %s1867 = ssub.s32 128, 128
          %1868 = vsyncadd %s1859, %s1867
          %s1869 = smul.addr %s36, 128
          %s1870 = scalar_lea.hbm %s13, %s1869
          %s1872 = sshll.u32 %s1862, 4
          %s1873 = int_to_ptr.vmem [resolvable:$true] %s1872
          %1875 = dma.vmem_to_hbm [thread:$0]  %s1873, 128, %s1870, %s1859
        $region128: #{tpu_custom_call.1} parent=71 // pred_fallthru
          _
      $region72: #{tpu_custom_call.1} parent=5 // pred_fallthru
        _
      %p1876 = scmp.le.s32.totalorder 2, %s31
      // Predicated region
      $region129: #{tpu_custom_call.1} parent=5 // pred_check
        %p1877 = pneg %p1876
      $region130: #{tpu_custom_call.1} parent=5 // pred_check_branch
        %1879 = sbr.rel (%p1877) target = $region132
      $region131: #{tpu_custom_call.1} parent=5 // pred_region
        %s1880 = ssub.s32 %s31, 2
        // Predicated region
        $region133: #{tpu_custom_call.1} parent=131 // pred_check
          %p1881 = pneg %p338
        $region134: #{tpu_custom_call.1} parent=131 // pred_check_branch
          %1883 = sbr.rel (%p1881) target = $region136
        $region135: #{tpu_custom_call.1} parent=131 // pred_region
          %s1884 = sand.u32 %s323, 1
          %s1885 = scalar_lea.sflag [#allocation8], %s1884
          %s1886 = sand.u32 %s323, 1
          %s1887 = smul.addr %s1886, 8
          %s1888 = scalar_lea.vmem [#allocation27], %s1887
          %1889 = dma.done %s1885, 128
        $region136: #{tpu_custom_call.1} parent=131 // pred_fallthru
          _
      $region132: #{tpu_custom_call.1} parent=5 // pred_fallthru
        _
    $region6: #{tpu_custom_call.1} parent=1 // loop_footer
      %s35 = sadd.s32 1, %s31
    $region7: #{tpu_custom_call.1} parent=1 // loop_footer_branch
      %30 = sbr.rel target = $region3
    $region8: #{tpu_custom_call.1} parent=1 // loop_exit
      _
    %1890 = vsyncpa [#allocation7], 1
    %s1891 = scalar_lea.sflag [#allocation7], 1
    %1892 = vsyncpa %s1891, 1
    %1893 = vsyncpa [#allocation10], 1
    %1894 = vsyncpa [#allocation13], 1
    %1895 = vsyncpa [#allocation16], 1
    %1896 = vsyncpa [#allocation19], 1
    %1897 = vsyncpa [#allocation22], 1
    %1898 = vsyncpa [#allocation25], 1
    %1899 = vsyncpa [#allocation8], 1
    %s1900 = scalar_lea.sflag [#allocation8], 1
    %1901 = vsyncpa %s1900, 1

</llo_original>
